<compile_context>
chip_gen: v6e
topology: v6e:2x2x1
jax: 0.10.0
libtpu: 0.0.40
codegen_flags: <defaults>
</compile_context>

<pallas_src>
import math

import jax
import jax.numpy as jnp
from jax.experimental import pallas as pl
from jax.experimental.pallas import tpu as pltpu

# ---------------- configuration ----------------
BATCH = 2
SEQ = 8
NUM_HEADS = 4
HEAD_DIM = 32
TOTAL_DIM = NUM_HEADS * HEAD_DIM            # 128 -> exactly one lane group
ROPE_FRACTION = 2
ROT_DIM = HEAD_DIM // ROPE_FRACTION         # rotated prefix of each head (16)
HALF = ROT_DIM // 2                         # 8
MAX_POS = 64
ROPE_BASE = 10000.0
POSITION_SCALE = 1.0

KV_PAD = 8                                  # rows appended to K/V: [register ; zeros]
KV_LEN = SEQ + KV_PAD                       # 16 (8-aligned key length)
NEG_INF = -1e30


# ---------------- Pallas kernel ----------------
def _rotary_attn_kernel(q_ref, k_ref, v_ref, cos_ref, sin_ref,
                        kreg_ref, vreg_ref, o_ref):
    """One batch row: RoPE on q/k (all heads at once), register token fused into
    padded K/V matmuls, lane-dense (S, 128) output in the native layout."""
    q = q_ref[0]                     # (S, 128)
    k = k_ref[0]                     # (S, 128)
    v = v_ref[0]                     # (S, 128)
    cos = cos_ref[...]               # (S, 128): cos on rot lanes, 1 on pass lanes
    sin = sin_ref[...]               # (S, 128): sin on rot lanes, 0 on pass lanes

    def rope(x):
        # rotate_half per 32-lane head block; pass-through lanes are killed by sin=0.
        # (a pltpu.roll(x, ±HALF) pair on the lane axis could move this to the XLU,
        #  but at a single (8,128) vreg the VPU cost is negligible.)
        parts = []
        for h in range(NUM_HEADS):
            b = h * HEAD_DIM
            x1 = x[:, b:b + HALF]
            x2 = x[:, b + HALF:b + ROT_DIM]
            xp = x[:, b + ROT_DIM:b + HEAD_DIM]
            parts.extend([-x2, x1, xp])
        comp = jnp.concatenate(parts, axis=-1)          # (S, 128)
        return x * cos + comp * sin

    q = rope(q) * (1.0 / math.sqrt(HEAD_DIM))           # fold softmax scale into q once
    k = rope(k)

    # fused register token: extend K/V to KV_LEN rows = [keys ; register ; zeros]
    k_ext = jnp.concatenate([k, kreg_ref[...]], axis=0)  # (KV_LEN, 128)
    v_ext = jnp.concatenate([v, vreg_ref[...]], axis=0)  # (KV_LEN, 128)

    # additive bias masking the zero-padded key columns (register at col SEQ is valid)
    col = jax.lax.broadcasted_iota(jnp.int32, (SEQ, KV_LEN), 1)
    bias = jnp.where(col <= SEQ, 0.0, NEG_INF).astype(jnp.float32)

    outs = []
    for h in range(NUM_HEADS):                           # unrolled: 4 heads
        lo, hi = h * HEAD_DIM, (h + 1) * HEAD_DIM
        qh = q[:, lo:hi]                                 # (S, D)
        kh = k_ext[:, lo:hi]                             # (KV_LEN, D)
        vh = v_ext[:, lo:hi]                             # (KV_LEN, D)

        s = jax.lax.dot_general(qh, kh, (((1,), (1,)), ((), ())),
                                preferred_element_type=jnp.float32) + bias
        m = jnp.max(s, axis=-1, keepdims=True)
        p = jnp.exp(s - m)                               # f32 softmax (as torch)
        denom = jnp.sum(p, axis=-1, keepdims=True)
        oh = jnp.dot(p.astype(vh.dtype), vh, preferred_element_type=jnp.float32)
        outs.append(oh * pl.reciprocal(denom, approx=False))

    o_ref[0] = jnp.concatenate(outs, axis=-1).astype(o_ref.dtype)   # (S, 128), lane-dense


def _pallas_attention(q, k, v, cos_t, sin_t, kreg_pad, vreg_pad):
    """q/k/v: (B, S, TOTAL_DIM) native layout; tables: (S, TOTAL_DIM);
    kreg_pad/vreg_pad: (KV_PAD, TOTAL_DIM)."""
    B, S, T = q.shape
    qkv_spec = pl.BlockSpec((1, S, T), lambda b: (b, 0, 0))
    tab_spec = pl.BlockSpec((S, T), lambda b: (0, 0))
    reg_spec = pl.BlockSpec((KV_PAD, T), lambda b: (0, 0))

    return pl.pallas_call(
        _rotary_attn_kernel,
        out_shape=jax.ShapeDtypeStruct((B, S, T), q.dtype),
        grid=(B,),
        in_specs=[qkv_spec, qkv_spec, qkv_spec,
                  tab_spec, tab_spec, reg_spec, reg_spec],
        out_specs=qkv_spec,
        compiler_params=pltpu.CompilerParams(
            dimension_semantics=("parallel",)),          # B=2 -> both TCs on v7x
    )(q, k, v, cos_t, sin_t, kreg_pad, vreg_pad)


# ---------------- module wrapper (glue in plain JAX) ----------------
def _rope_sin_cos(seq_len):
    """(S, ROT_DIM) sin/cos, exactly RotaryEmbedding's buffers for positions 0..S-1."""
    freq_ar = jnp.arange(0, ROT_DIM, 2, dtype=jnp.float32)
    inv_freq = 1.0 / (ROPE_BASE ** (freq_ar / ROT_DIM))                 # (ROT_DIM/2,)
    pos = jnp.arange(0, MAX_POS, dtype=jnp.float32) * POSITION_SCALE    # (MAX_POS,)
    freqs = pos[:, None] * inv_freq[None, :]                            # (MAX_POS, ROT_DIM/2)
    freqs = jnp.concatenate([freqs, freqs], axis=-1)                    # (MAX_POS, ROT_DIM)
    return jnp.sin(freqs)[:seq_len], jnp.cos(freqs)[:seq_len]


def _kernel_rope_tables(seq_len):
    """Full-width (S, TOTAL_DIM) tables tiled over heads: cos=1 / sin=0 on the
    non-rotated half so in-kernel RoPE is a single elementwise expression."""
    sin, cos = _rope_sin_cos(seq_len)
    pass_n = HEAD_DIM - ROT_DIM
    cos_h = jnp.concatenate([cos, jnp.ones((seq_len, pass_n), jnp.float32)], axis=-1)
    sin_h = jnp.concatenate([sin, jnp.zeros((seq_len, pass_n), jnp.float32)], axis=-1)
    return jnp.tile(cos_h, (1, NUM_HEADS)), jnp.tile(sin_h, (1, NUM_HEADS))


@jax.jit
def rotary_attention(query_states, key_states, value_states,
                     k_register, v_register, register_mask):
    """query/key/value: (B, S, total_dim) -> output (B, S, total_dim)."""
    B, S, _ = query_states.shape
    cos_t, sin_t = _kernel_rope_tables(S)

    # register tokens laid out head-major / lane-dense, padded to KV_PAD rows
    # (rot dims of the k register are zeroed via register_mask, as in the module)
    kreg = (k_register * register_mask)[0, :, 0, :].reshape(1, TOTAL_DIM)
    vreg = v_register[0, :, 0, :].reshape(1, TOTAL_DIM)
    zpad = jnp.zeros((KV_PAD - 1, TOTAL_DIM), kreg.dtype)
    kreg_pad = jnp.concatenate([kreg, zpad], axis=0)     # (KV_PAD, 128)
    vreg_pad = jnp.concatenate([vreg, zpad], axis=0)     # (KV_PAD, 128)

    return _pallas_attention(query_states, key_states, value_states,
                             cos_t, sin_t, kreg_pad, vreg_pad)


# ---------------- pure-JAX reference (mirrors the PyTorch forward) ----------------
def _reference(query_states, key_states, value_states,
               k_register, v_register, register_mask):
    B, S, _ = query_states.shape
    qh = query_states.reshape(B, S, NUM_HEADS, HEAD_DIM).transpose(0, 2, 1, 3)
    kh = key_states.reshape(B, S, NUM_HEADS, HEAD_DIM).transpose(0, 2, 1, 3)
    vh = value_states.reshape(B, S, NUM_HEADS, HEAD_DIM).transpose(0, 2, 1, 3)

    sin, cos = _rope_sin_cos(S)
    sin = sin[None, None]                          # (1,1,S,ROT)
    cos = cos[None, None]

    def rope(x):
        rot, no_rot = x[..., :ROT_DIM], x[..., ROT_DIM:]
        x1, x2 = rot[..., :HALF], rot[..., HALF:]
        rot = rot * cos + jnp.concatenate([-x2, x1], axis=-1) * sin
        return jnp.concatenate([rot, no_rot], axis=-1)

    qh, kh = rope(qh), rope(kh)
    kreg = jnp.broadcast_to(k_register * register_mask, (B, NUM_HEADS, 1, HEAD_DIM))
    vreg = jnp.broadcast_to(v_register, (B, NUM_HEADS, 1, HEAD_DIM))
    kh = jnp.concatenate([kh, kreg], axis=2)
    vh = jnp.concatenate([vh, vreg], axis=2)

    w = jnp.einsum("bhqd,bhkd->bhqk", qh, kh) / math.sqrt(HEAD_DIM)
    w = jax.nn.softmax(w.astype(jnp.float32), axis=-1).astype(qh.dtype)
    o = jnp.einsum("bhqk,bhkd->bhqd", w, vh)
    return o.transpose(0, 2, 1, 3).reshape(B, S, TOTAL_DIM)


if __name__ == "__main__":
    key = jax.random.PRNGKey(0)
    k1, k2, k3, k4, k5 = jax.random.split(key, 5)

    q = jax.random.normal(k1, (BATCH, SEQ, TOTAL_DIM), dtype=jnp.float32)
    k = jax.random.normal(k2, (BATCH, SEQ, TOTAL_DIM), dtype=jnp.float32)
    v = jax.random.normal(k3, (BATCH, SEQ, TOTAL_DIM), dtype=jnp.float32)

    # parameters (deterministic init, shapes from nn.Module.__init__)
    k_register = jax.random.normal(k4, (1, NUM_HEADS, 1, HEAD_DIM), dtype=jnp.float32)
    v_register = jax.random.normal(k5, (1, NUM_HEADS, 1, HEAD_DIM), dtype=jnp.float32)
    register_mask = jnp.ones((1, NUM_HEADS, 1, HEAD_DIM), dtype=jnp.float32)
    register_mask = register_mask.at[:, :, :, :ROT_DIM].set(0.0)

    out = rotary_attention(q, k, v, k_register, v_register, register_mask)
    out = jax.block_until_ready(out)

    ref = _reference(q, k, v, k_register, v_register, register_mask)
    assert out.shape == (BATCH, SEQ, TOTAL_DIM)
    assert jnp.max(jnp.abs(out - ref)) < 1e-4, "Pallas output mismatch vs reference"

    # TODO(synk): past_key_value cache update, position_ids gather, and additive
    # attention_mask paths are not exercised (forward called with defaults = None).
    print("KERNEL_OK")
</pallas_src>

<mosaic_0001>
module attributes {stable_mosaic.version = 11 : i64} {
  func.func @_rotary_attn_kernel(%arg0: i32, %arg1: memref<1x8x128xf32, #tpu.memory_space<vmem>>, %arg2: memref<1x8x128xf32, #tpu.memory_space<vmem>>, %arg3: memref<1x8x128xf32, #tpu.memory_space<vmem>>, %arg4: memref<8x128xf32, #tpu.memory_space<vmem>>, %arg5: memref<8x128xf32, #tpu.memory_space<vmem>>, %arg6: memref<8x128xf32, #tpu.memory_space<vmem>>, %arg7: memref<8x128xf32, #tpu.memory_space<vmem>>, %arg8: memref<1x8x128xf32, #tpu.memory_space<vmem>>) attributes {dimension_semantics = [#tpu.dimension_semantics<parallel>], iteration_bounds = array<i64: 2>, scalar_prefetch = 0 : i64, scratch_operands = 0 : i64, tpu.core_type = #tpu.core_type<tc>, window_params = [{transform_indices = @transform_0, window_bounds = array<i64: 1, 8, 128>}, {transform_indices = @transform_1, window_bounds = array<i64: 1, 8, 128>}, {transform_indices = @transform_2, window_bounds = array<i64: 1, 8, 128>}, {pipeline_mode = #tpu.pipeline_mode<synchronous>, transform_indices = @transform_3, window_bounds = array<i64: 8, 128>}, {pipeline_mode = #tpu.pipeline_mode<synchronous>, transform_indices = @transform_4, window_bounds = array<i64: 8, 128>}, {pipeline_mode = #tpu.pipeline_mode<synchronous>, transform_indices = @transform_5, window_bounds = array<i64: 8, 128>}, {pipeline_mode = #tpu.pipeline_mode<synchronous>, transform_indices = @transform_6, window_bounds = array<i64: 8, 128>}, {transform_indices = @transform_7, window_bounds = array<i64: 1, 8, 128>}]} {
    %c0 = arith.constant 0 : index
    %c0_0 = arith.constant 0 : index
    %c0_1 = arith.constant 0 : index
    %0 = vector.load %arg1[%c0, %c0_0, %c0_1] : memref<1x8x128xf32, #tpu.memory_space<vmem>>, vector<1x8x128xf32>
    %1 = vector.shape_cast %0 : vector<1x8x128xf32> to vector<8x128xf32>
    %c0_2 = arith.constant 0 : index
    %c0_3 = arith.constant 0 : index
    %c0_4 = arith.constant 0 : index
    %2 = vector.load %arg2[%c0_2, %c0_3, %c0_4] : memref<1x8x128xf32, #tpu.memory_space<vmem>>, vector<1x8x128xf32>
    %3 = vector.shape_cast %2 : vector<1x8x128xf32> to vector<8x128xf32>
    %c0_5 = arith.constant 0 : index
    %c0_6 = arith.constant 0 : index
    %c0_7 = arith.constant 0 : index
    %4 = vector.load %arg3[%c0_5, %c0_6, %c0_7] : memref<1x8x128xf32, #tpu.memory_space<vmem>>, vector<1x8x128xf32>
    %5 = vector.shape_cast %4 : vector<1x8x128xf32> to vector<8x128xf32>
    %c0_8 = arith.constant 0 : index
    %c0_9 = arith.constant 0 : index
    %6 = vector.load %arg4[%c0_8, %c0_9] : memref<8x128xf32, #tpu.memory_space<vmem>>, vector<8x128xf32>
    %c0_10 = arith.constant 0 : index
    %c0_11 = arith.constant 0 : index
    %7 = vector.load %arg5[%c0_10, %c0_11] : memref<8x128xf32, #tpu.memory_space<vmem>>, vector<8x128xf32>
    %8 = vector.extract_strided_slice %1 {offsets = [0, 0], sizes = [8, 8], strides = [1, 1]} : vector<8x128xf32> to vector<8x8xf32>
    %9 = vector.extract_strided_slice %1 {offsets = [0, 8], sizes = [8, 8], strides = [1, 1]} : vector<8x128xf32> to vector<8x8xf32>
    %10 = vector.extract_strided_slice %1 {offsets = [0, 16], sizes = [8, 16], strides = [1, 1]} : vector<8x128xf32> to vector<8x16xf32>
    %cst = arith.constant 0.000000e+00 : f32
    %11 = vector.broadcast %cst : f32 to vector<8x8xf32>
    %12 = arith.subf %11, %9 : vector<8x8xf32>
    %13 = vector.extract_strided_slice %1 {offsets = [0, 32], sizes = [8, 8], strides = [1, 1]} : vector<8x128xf32> to vector<8x8xf32>
    %14 = vector.extract_strided_slice %1 {offsets = [0, 40], sizes = [8, 8], strides = [1, 1]} : vector<8x128xf32> to vector<8x8xf32>
    %15 = vector.extract_strided_slice %1 {offsets = [0, 48], sizes = [8, 16], strides = [1, 1]} : vector<8x128xf32> to vector<8x16xf32>
    %cst_12 = arith.constant 0.000000e+00 : f32
    %16 = vector.broadcast %cst_12 : f32 to vector<8x8xf32>
    %17 = arith.subf %16, %14 : vector<8x8xf32>
    %18 = vector.extract_strided_slice %1 {offsets = [0, 64], sizes = [8, 8], strides = [1, 1]} : vector<8x128xf32> to vector<8x8xf32>
    %19 = vector.extract_strided_slice %1 {offsets = [0, 72], sizes = [8, 8], strides = [1, 1]} : vector<8x128xf32> to vector<8x8xf32>
    %20 = vector.extract_strided_slice %1 {offsets = [0, 80], sizes = [8, 16], strides = [1, 1]} : vector<8x128xf32> to vector<8x16xf32>
    %cst_13 = arith.constant 0.000000e+00 : f32
    %21 = vector.broadcast %cst_13 : f32 to vector<8x8xf32>
    %22 = arith.subf %21, %19 : vector<8x8xf32>
    %23 = vector.extract_strided_slice %1 {offsets = [0, 96], sizes = [8, 8], strides = [1, 1]} : vector<8x128xf32> to vector<8x8xf32>
    %24 = vector.extract_strided_slice %1 {offsets = [0, 104], sizes = [8, 8], strides = [1, 1]} : vector<8x128xf32> to vector<8x8xf32>
    %25 = vector.extract_strided_slice %1 {offsets = [0, 112], sizes = [8, 16], strides = [1, 1]} : vector<8x128xf32> to vector<8x16xf32>
    %cst_14 = arith.constant 0.000000e+00 : f32
    %26 = vector.broadcast %cst_14 : f32 to vector<8x8xf32>
    %27 = arith.subf %26, %24 : vector<8x8xf32>
    %28 = tpu.concatenate %12, %8, %10, %17, %13, %15, %22, %18, %20, %27, %23, %25 in 1 : vector<8x8xf32>, vector<8x8xf32>, vector<8x16xf32>, vector<8x8xf32>, vector<8x8xf32>, vector<8x16xf32>, vector<8x8xf32>, vector<8x8xf32>, vector<8x16xf32>, vector<8x8xf32>, vector<8x8xf32>, vector<8x16xf32> -> vector<8x128xf32>
    %29 = arith.mulf %1, %6 : vector<8x128xf32>
    %30 = arith.mulf %28, %7 : vector<8x128xf32>
    %31 = arith.addf %29, %30 : vector<8x128xf32>
    %cst_15 = arith.constant 0.176776692 : f32
    %32 = vector.broadcast %cst_15 : f32 to vector<8x128xf32>
    %33 = arith.mulf %31, %32 : vector<8x128xf32>
    %34 = vector.extract_strided_slice %3 {offsets = [0, 0], sizes = [8, 8], strides = [1, 1]} : vector<8x128xf32> to vector<8x8xf32>
    %35 = vector.extract_strided_slice %3 {offsets = [0, 8], sizes = [8, 8], strides = [1, 1]} : vector<8x128xf32> to vector<8x8xf32>
    %36 = vector.extract_strided_slice %3 {offsets = [0, 16], sizes = [8, 16], strides = [1, 1]} : vector<8x128xf32> to vector<8x16xf32>
    %cst_16 = arith.constant 0.000000e+00 : f32
    %37 = vector.broadcast %cst_16 : f32 to vector<8x8xf32>
    %38 = arith.subf %37, %35 : vector<8x8xf32>
    %39 = vector.extract_strided_slice %3 {offsets = [0, 32], sizes = [8, 8], strides = [1, 1]} : vector<8x128xf32> to vector<8x8xf32>
    %40 = vector.extract_strided_slice %3 {offsets = [0, 40], sizes = [8, 8], strides = [1, 1]} : vector<8x128xf32> to vector<8x8xf32>
    %41 = vector.extract_strided_slice %3 {offsets = [0, 48], sizes = [8, 16], strides = [1, 1]} : vector<8x128xf32> to vector<8x16xf32>
    %cst_17 = arith.constant 0.000000e+00 : f32
    %42 = vector.broadcast %cst_17 : f32 to vector<8x8xf32>
    %43 = arith.subf %42, %40 : vector<8x8xf32>
    %44 = vector.extract_strided_slice %3 {offsets = [0, 64], sizes = [8, 8], strides = [1, 1]} : vector<8x128xf32> to vector<8x8xf32>
    %45 = vector.extract_strided_slice %3 {offsets = [0, 72], sizes = [8, 8], strides = [1, 1]} : vector<8x128xf32> to vector<8x8xf32>
    %46 = vector.extract_strided_slice %3 {offsets = [0, 80], sizes = [8, 16], strides = [1, 1]} : vector<8x128xf32> to vector<8x16xf32>
    %cst_18 = arith.constant 0.000000e+00 : f32
    %47 = vector.broadcast %cst_18 : f32 to vector<8x8xf32>
    %48 = arith.subf %47, %45 : vector<8x8xf32>
    %49 = vector.extract_strided_slice %3 {offsets = [0, 96], sizes = [8, 8], strides = [1, 1]} : vector<8x128xf32> to vector<8x8xf32>
    %50 = vector.extract_strided_slice %3 {offsets = [0, 104], sizes = [8, 8], strides = [1, 1]} : vector<8x128xf32> to vector<8x8xf32>
    %51 = vector.extract_strided_slice %3 {offsets = [0, 112], sizes = [8, 16], strides = [1, 1]} : vector<8x128xf32> to vector<8x16xf32>
    %cst_19 = arith.constant 0.000000e+00 : f32
    %52 = vector.broadcast %cst_19 : f32 to vector<8x8xf32>
    %53 = arith.subf %52, %50 : vector<8x8xf32>
    %54 = tpu.concatenate %38, %34, %36, %43, %39, %41, %48, %44, %46, %53, %49, %51 in 1 : vector<8x8xf32>, vector<8x8xf32>, vector<8x16xf32>, vector<8x8xf32>, vector<8x8xf32>, vector<8x16xf32>, vector<8x8xf32>, vector<8x8xf32>, vector<8x16xf32>, vector<8x8xf32>, vector<8x8xf32>, vector<8x16xf32> -> vector<8x128xf32>
    %55 = arith.mulf %3, %6 : vector<8x128xf32>
    %56 = arith.mulf %54, %7 : vector<8x128xf32>
    %57 = arith.addf %55, %56 : vector<8x128xf32>
    %c0_20 = arith.constant 0 : index
    %c0_21 = arith.constant 0 : index
    %58 = vector.load %arg6[%c0_20, %c0_21] : memref<8x128xf32, #tpu.memory_space<vmem>>, vector<8x128xf32>
    %59 = tpu.concatenate %57, %58 in 0 : vector<8x128xf32>, vector<8x128xf32> -> vector<16x128xf32>
    %c0_22 = arith.constant 0 : index
    %c0_23 = arith.constant 0 : index
    %60 = vector.load %arg7[%c0_22, %c0_23] : memref<8x128xf32, #tpu.memory_space<vmem>>, vector<8x128xf32>
    %61 = tpu.concatenate %5, %60 in 0 : vector<8x128xf32>, vector<8x128xf32> -> vector<16x128xf32>
    %62 = tpu.iota {dimensions = array<i32: 1>} : vector<8x16xi32>
    %c8_i32 = arith.constant 8 : i32
    %63 = vector.broadcast %c8_i32 : i32 to vector<8x16xi32>
    %64 = arith.cmpi sle, %62, %63 : vector<8x16xi32>
    %cst_24 = arith.constant 0.000000e+00 : f32
    %cst_25 = arith.constant -1.000000e+30 : f32
    %65 = vector.broadcast %cst_24 : f32 to vector<8x16xf32>
    %66 = vector.broadcast %cst_25 : f32 to vector<8x16xf32>
    %67 = arith.select %64, %65, %66 : vector<8x16xi1>, vector<8x16xf32>
    %68 = vector.extract_strided_slice %33 {offsets = [0, 0], sizes = [8, 32], strides = [1, 1]} : vector<8x128xf32> to vector<8x32xf32>
    %69 = vector.extract_strided_slice %59 {offsets = [0, 0], sizes = [16, 32], strides = [1, 1]} : vector<16x128xf32> to vector<16x32xf32>
    %70 = vector.extract_strided_slice %61 {offsets = [0, 0], sizes = [16, 32], strides = [1, 1]} : vector<16x128xf32> to vector<16x32xf32>
    %cst_26 = arith.constant dense<0.000000e+00> : vector<8x16xf32>
    %71 = tpu.matmul %68, %69, %cst_26 {dimension_numbers = #tpu.dot_dimension_numbers<[1], [1], [0], [0], [0, 0, 1, 0], [], []>} : vector<8x32xf32>, vector<16x32xf32>, vector<8x16xf32> -> vector<8x16xf32>
    %72 = arith.addf %71, %67 : vector<8x16xf32>
    %cst_27 = arith.constant dense<0xFF800000> : vector<8xf32>
    %73 = vector.multi_reduction <maximumf>, %72, %cst_27 [1] : vector<8x16xf32> to vector<8xf32>
    %74 = vector.shape_cast %73 : vector<8xf32> to vector<8x1xf32>
    %75 = vector.broadcast %74 : vector<8x1xf32> to vector<8x16xf32>
    %76 = arith.subf %72, %75 : vector<8x16xf32>
    %77 = math.exp %76 : vector<8x16xf32>
    %cst_28 = arith.constant dense<0.000000e+00> : vector<8xf32>
    %78 = vector.multi_reduction <add>, %77, %cst_28 [1] : vector<8x16xf32> to vector<8xf32>
    %79 = vector.shape_cast %78 : vector<8xf32> to vector<8x1xf32>
    %cst_29 = arith.constant dense<0.000000e+00> : vector<8x32xf32>
    %80 = tpu.matmul %77, %70, %cst_29 {dimension_numbers = #tpu.dot_dimension_numbers<[1], [0], [0], [1], [0, 0, 1, 1], [], []>} : vector<8x16xf32>, vector<16x32xf32>, vector<8x32xf32> -> vector<8x32xf32>
    %81 = tpu.reciprocal %79 : vector<8x1xf32> -> vector<8x1xf32>
    %82 = vector.broadcast %81 : vector<8x1xf32> to vector<8x32xf32>
    %83 = arith.mulf %80, %82 : vector<8x32xf32>
    %84 = vector.extract_strided_slice %33 {offsets = [0, 32], sizes = [8, 32], strides = [1, 1]} : vector<8x128xf32> to vector<8x32xf32>
    %85 = vector.extract_strided_slice %59 {offsets = [0, 32], sizes = [16, 32], strides = [1, 1]} : vector<16x128xf32> to vector<16x32xf32>
    %86 = vector.extract_strided_slice %61 {offsets = [0, 32], sizes = [16, 32], strides = [1, 1]} : vector<16x128xf32> to vector<16x32xf32>
    %cst_30 = arith.constant dense<0.000000e+00> : vector<8x16xf32>
    %87 = tpu.matmul %84, %85, %cst_30 {dimension_numbers = #tpu.dot_dimension_numbers<[1], [1], [0], [0], [0, 0, 1, 0], [], []>} : vector<8x32xf32>, vector<16x32xf32>, vector<8x16xf32> -> vector<8x16xf32>
    %88 = arith.addf %87, %67 : vector<8x16xf32>
    %cst_31 = arith.constant dense<0xFF800000> : vector<8xf32>
    %89 = vector.multi_reduction <maximumf>, %88, %cst_31 [1] : vector<8x16xf32> to vector<8xf32>
    %90 = vector.shape_cast %89 : vector<8xf32> to vector<8x1xf32>
    %91 = vector.broadcast %90 : vector<8x1xf32> to vector<8x16xf32>
    %92 = arith.subf %88, %91 : vector<8x16xf32>
    %93 = math.exp %92 : vector<8x16xf32>
    %cst_32 = arith.constant dense<0.000000e+00> : vector<8xf32>
    %94 = vector.multi_reduction <add>, %93, %cst_32 [1] : vector<8x16xf32> to vector<8xf32>
    %95 = vector.shape_cast %94 : vector<8xf32> to vector<8x1xf32>
    %cst_33 = arith.constant dense<0.000000e+00> : vector<8x32xf32>
    %96 = tpu.matmul %93, %86, %cst_33 {dimension_numbers = #tpu.dot_dimension_numbers<[1], [0], [0], [1], [0, 0, 1, 1], [], []>} : vector<8x16xf32>, vector<16x32xf32>, vector<8x32xf32> -> vector<8x32xf32>
    %97 = tpu.reciprocal %95 : vector<8x1xf32> -> vector<8x1xf32>
    %98 = vector.broadcast %97 : vector<8x1xf32> to vector<8x32xf32>
    %99 = arith.mulf %96, %98 : vector<8x32xf32>
    %100 = vector.extract_strided_slice %33 {offsets = [0, 64], sizes = [8, 32], strides = [1, 1]} : vector<8x128xf32> to vector<8x32xf32>
    %101 = vector.extract_strided_slice %59 {offsets = [0, 64], sizes = [16, 32], strides = [1, 1]} : vector<16x128xf32> to vector<16x32xf32>
    %102 = vector.extract_strided_slice %61 {offsets = [0, 64], sizes = [16, 32], strides = [1, 1]} : vector<16x128xf32> to vector<16x32xf32>
    %cst_34 = arith.constant dense<0.000000e+00> : vector<8x16xf32>
    %103 = tpu.matmul %100, %101, %cst_34 {dimension_numbers = #tpu.dot_dimension_numbers<[1], [1], [0], [0], [0, 0, 1, 0], [], []>} : vector<8x32xf32>, vector<16x32xf32>, vector<8x16xf32> -> vector<8x16xf32>
    %104 = arith.addf %103, %67 : vector<8x16xf32>
    %cst_35 = arith.constant dense<0xFF800000> : vector<8xf32>
    %105 = vector.multi_reduction <maximumf>, %104, %cst_35 [1] : vector<8x16xf32> to vector<8xf32>
    %106 = vector.shape_cast %105 : vector<8xf32> to vector<8x1xf32>
    %107 = vector.broadcast %106 : vector<8x1xf32> to vector<8x16xf32>
    %108 = arith.subf %104, %107 : vector<8x16xf32>
    %109 = math.exp %108 : vector<8x16xf32>
    %cst_36 = arith.constant dense<0.000000e+00> : vector<8xf32>
    %110 = vector.multi_reduction <add>, %109, %cst_36 [1] : vector<8x16xf32> to vector<8xf32>
    %111 = vector.shape_cast %110 : vector<8xf32> to vector<8x1xf32>
    %cst_37 = arith.constant dense<0.000000e+00> : vector<8x32xf32>
    %112 = tpu.matmul %109, %102, %cst_37 {dimension_numbers = #tpu.dot_dimension_numbers<[1], [0], [0], [1], [0, 0, 1, 1], [], []>} : vector<8x16xf32>, vector<16x32xf32>, vector<8x32xf32> -> vector<8x32xf32>
    %113 = tpu.reciprocal %111 : vector<8x1xf32> -> vector<8x1xf32>
    %114 = vector.broadcast %113 : vector<8x1xf32> to vector<8x32xf32>
    %115 = arith.mulf %112, %114 : vector<8x32xf32>
    %116 = vector.extract_strided_slice %33 {offsets = [0, 96], sizes = [8, 32], strides = [1, 1]} : vector<8x128xf32> to vector<8x32xf32>
    %117 = vector.extract_strided_slice %59 {offsets = [0, 96], sizes = [16, 32], strides = [1, 1]} : vector<16x128xf32> to vector<16x32xf32>
    %118 = vector.extract_strided_slice %61 {offsets = [0, 96], sizes = [16, 32], strides = [1, 1]} : vector<16x128xf32> to vector<16x32xf32>
    %cst_38 = arith.constant dense<0.000000e+00> : vector<8x16xf32>
    %119 = tpu.matmul %116, %117, %cst_38 {dimension_numbers = #tpu.dot_dimension_numbers<[1], [1], [0], [0], [0, 0, 1, 0], [], []>} : vector<8x32xf32>, vector<16x32xf32>, vector<8x16xf32> -> vector<8x16xf32>
    %120 = arith.addf %119, %67 : vector<8x16xf32>
    %cst_39 = arith.constant dense<0xFF800000> : vector<8xf32>
    %121 = vector.multi_reduction <maximumf>, %120, %cst_39 [1] : vector<8x16xf32> to vector<8xf32>
    %122 = vector.shape_cast %121 : vector<8xf32> to vector<8x1xf32>
    %123 = vector.broadcast %122 : vector<8x1xf32> to vector<8x16xf32>
    %124 = arith.subf %120, %123 : vector<8x16xf32>
    %125 = math.exp %124 : vector<8x16xf32>
    %cst_40 = arith.constant dense<0.000000e+00> : vector<8xf32>
    %126 = vector.multi_reduction <add>, %125, %cst_40 [1] : vector<8x16xf32> to vector<8xf32>
    %127 = vector.shape_cast %126 : vector<8xf32> to vector<8x1xf32>
    %cst_41 = arith.constant dense<0.000000e+00> : vector<8x32xf32>
    %128 = tpu.matmul %125, %118, %cst_41 {dimension_numbers = #tpu.dot_dimension_numbers<[1], [0], [0], [1], [0, 0, 1, 1], [], []>} : vector<8x16xf32>, vector<16x32xf32>, vector<8x32xf32> -> vector<8x32xf32>
    %129 = tpu.reciprocal %127 : vector<8x1xf32> -> vector<8x1xf32>
    %130 = vector.broadcast %129 : vector<8x1xf32> to vector<8x32xf32>
    %131 = arith.mulf %128, %130 : vector<8x32xf32>
    %132 = tpu.concatenate %83, %99, %115, %131 in 1 : vector<8x32xf32>, vector<8x32xf32>, vector<8x32xf32>, vector<8x32xf32> -> vector<8x128xf32>
    %c0_42 = arith.constant 0 : index
    %c0_43 = arith.constant 0 : index
    %c0_44 = arith.constant 0 : index
    %133 = vector.load %arg8[%c0_42, %c0_43, %c0_44] : memref<1x8x128xf32, #tpu.memory_space<vmem>>, vector<1x8x128xf32>
    %134 = vector.shape_cast %133 : vector<1x8x128xf32> to vector<8x128xf32>
    %135 = vector.shape_cast %132 : vector<8x128xf32> to vector<1x8x128xf32>
    tpu.vector_store %arg8[%c0_42, %c0_43, %c0_44], %135 {strides = array<i32>} : memref<1x8x128xf32, #tpu.memory_space<vmem>>, vector<1x8x128xf32>,
    return
  }
  func.func @transform_0(%arg0: i32) -> (i32, i32, i32) {
    %c0_i32 = arith.constant 0 : i32
    %c0_i32_0 = arith.constant 0 : i32
    %c0_i32_1 = arith.constant 0 : i32
    return %arg0, %c0_i32, %c0_i32_0 : i32, i32, i32
  }
  func.func @transform_1(%arg0: i32) -> (i32, i32, i32) {
    %c0_i32 = arith.constant 0 : i32
    %c0_i32_0 = arith.constant 0 : i32
    %c0_i32_1 = arith.constant 0 : i32
    return %arg0, %c0_i32, %c0_i32_0 : i32, i32, i32
  }
  func.func @transform_2(%arg0: i32) -> (i32, i32, i32) {
    %c0_i32 = arith.constant 0 : i32
    %c0_i32_0 = arith.constant 0 : i32
    %c0_i32_1 = arith.constant 0 : i32
    return %arg0, %c0_i32, %c0_i32_0 : i32, i32, i32
  }
  func.func @transform_3(%arg0: i32) -> (i32, i32) {
    %c0_i32 = arith.constant 0 : i32
    %c0_i32_0 = arith.constant 0 : i32
    %c0_i32_1 = arith.constant 0 : i32
    return %c0_i32, %c0_i32_0 : i32, i32
  }
  func.func @transform_4(%arg0: i32) -> (i32, i32) {
    %c0_i32 = arith.constant 0 : i32
    %c0_i32_0 = arith.constant 0 : i32
    %c0_i32_1 = arith.constant 0 : i32
    return %c0_i32, %c0_i32_0 : i32, i32
  }
  func.func @transform_5(%arg0: i32) -> (i32, i32) {
    %c0_i32 = arith.constant 0 : i32
    %c0_i32_0 = arith.constant 0 : i32
    %c0_i32_1 = arith.constant 0 : i32
    return %c0_i32, %c0_i32_0 : i32, i32
  }
  func.func @transform_6(%arg0: i32) -> (i32, i32) {
    %c0_i32 = arith.constant 0 : i32
    %c0_i32_0 = arith.constant 0 : i32
    %c0_i32_1 = arith.constant 0 : i32
    return %c0_i32, %c0_i32_0 : i32, i32
  }
  func.func @transform_7(%arg0: i32) -> (i32, i32, i32) {
    %c0_i32 = arith.constant 0 : i32
    %c0_i32_0 = arith.constant 0 : i32
    %c0_i32_1 = arith.constant 0 : i32
    return %arg0, %c0_i32, %c0_i32_0 : i32, i32, i32
  }
}

</mosaic_0001>

<llo_original>
// kernel: tile.14
$region0: #{tile.14}
  %s0 = inlined_call_operand.vmem [shape: f32[8,4,32], index: 0, kind: input, shape index: {}]
  %s1 = inlined_call_operand.vmem [shape: f32[8,128], index: 1, kind: output, shape index: {}]
  $region1: #{tile.14} parent=0
    #allocation0 [shape = 'u8[32768]{0}', space=vmem, size = 0x8000, scoped, tag = 'scoped mem for input reshape']
    %s3 = sshll.u32 1, 4
    %s4 = ssub.s32 %s3, 1
    %s5 = smul.addr 4, 7
    %s6 = scalar_lea.vmem %s0, %s5
    %v7 = vld [vmem:[%s6] sm:%s4]
    %s8 = scalar_lea.vmem [#allocation0], 56
    %9 = vst [vmem:[%s8] sm:%s4] %v7
    %s10 = smul.addr 4, 6
    %s11 = scalar_lea.vmem %s0, %s10
    %v12 = vld [vmem:[%s11] sm:%s4]
    %s13 = scalar_lea.vmem [#allocation0], 48
    %14 = vst [vmem:[%s13] sm:%s4] %v12
    %s15 = smul.addr 4, 5
    %s16 = scalar_lea.vmem %s0, %s15
    %v17 = vld [vmem:[%s16] sm:%s4]
    %s18 = scalar_lea.vmem [#allocation0], 40
    %19 = vst [vmem:[%s18] sm:%s4] %v17
    %s20 = smul.addr 4, 4
    %s21 = scalar_lea.vmem %s0, %s20
    %v22 = vld [vmem:[%s21] sm:%s4]
    %s23 = scalar_lea.vmem [#allocation0], 32
    %24 = vst [vmem:[%s23] sm:%s4] %v22
    %s25 = smul.addr 4, 3
    %s26 = scalar_lea.vmem %s0, %s25
    %v27 = vld [vmem:[%s26] sm:%s4]
    %s28 = scalar_lea.vmem [#allocation0], 24
    %29 = vst [vmem:[%s28] sm:%s4] %v27
    %s30 = smul.addr 4, 2
    %s31 = scalar_lea.vmem %s0, %s30
    %v32 = vld [vmem:[%s31] sm:%s4]
    %s33 = scalar_lea.vmem [#allocation0], 16
    %34 = vst [vmem:[%s33] sm:%s4] %v32
    %s35 = scalar_lea.vmem %s0, 4
    %v36 = vld [vmem:[%s35] sm:%s4]
    %s37 = scalar_lea.vmem [#allocation0], 8
    %38 = vst [vmem:[%s37] sm:%s4] %v36
    %v39 = vld [vmem:[%s0] sm:%s4]
    %40 = vst [vmem:[#allocation0] sm:%s4] %v39
    %v41 = vld [vmem:[#allocation0] ss:$8 sm:$0xf]
    %v42 = vld [vmem:[#allocation0] ss:$8 sm:$0xf0]
    %vm43 = vcmask 1047556
    %v44 = vsel %vm43, %v42, %v41
    %vm45 = vcmask 261120
    %46 = vst.msk [vmem:[%s1] sm:$0xff] %vm45, %v44
    %s47 = scalar_lea.vmem [#allocation0], 3
    %v48 = vld [vmem:[%s47] ss:$8 sm:$0xf]
    %s49 = scalar_lea.vmem [#allocation0], 3
    %v50 = vld [vmem:[%s49] ss:$8 sm:$0xf0]
    %vm51 = vcmask 1047556
    %v52 = vsel %vm51, %v50, %v48
    %53 = vrot.lane.b32.xlu0 %v52, 96
    %v54 = vpop.permute.xlu0 %53
    %vm55 = vcmask 1048320
    %56 = vst.msk [vmem:[%s1] sm:$0xff] %vm55, %v54
    %s57 = scalar_lea.vmem [#allocation0], 2
    %v58 = vld [vmem:[%s57] ss:$8 sm:$0xf]
    %s59 = scalar_lea.vmem [#allocation0], 2
    %v60 = vld [vmem:[%s59] ss:$8 sm:$0xf0]
    %vm61 = vcmask 1047556
    %v62 = vsel %vm61, %v60, %v58
    %63 = vrot.lane.b32.xlu0 %v62, 64
    %v64 = vpop.permute.xlu0 %63
    %vm65 = vcmask 785920
    %66 = vst.msk [vmem:[%s1] sm:$0xff] %vm65, %v64
    %s67 = scalar_lea.vmem [#allocation0], 1
    %v68 = vld [vmem:[%s67] ss:$8 sm:$0xf]
    %s69 = scalar_lea.vmem [#allocation0], 1
    %v70 = vld [vmem:[%s69] ss:$8 sm:$0xf0]
    %vm71 = vcmask 1047556
    %v72 = vsel %vm71, %v70, %v68
    %73 = vrot.lane.b32.xlu0 %v72, 32
    %v74 = vpop.permute.xlu0 %73
    %vm75 = vcmask 523520
    %76 = vst.msk [vmem:[%s1] sm:$0xff] %vm75, %v74

// kernel: squeeze.3
$region0: #{squeeze.3}
  %s0 = inlined_call_operand.vmem [shape: f32[4,32], index: 0, kind: input, shape index: {}]
  %s1 = inlined_call_operand.vmem [shape: f32[1,128], index: 1, kind: output, shape index: {}]
  $region1: #{squeeze.3} parent=0
    #allocation0 [shape = 'u8[4096]{0}', space=vmem, size = 0x1000, scoped, tag = 'scoped mem for output reshape']
    #allocation1 [shape = 'u8[4096]{0}', space=vmem, size = 0x1000, scoped, tag = 'scoped mem for input reshape']
    %s3 = sshll.u32 1, 4
    %s4 = ssub.s32 %s3, 1
    %v5 = vld [vmem:[%s0] sm:%s4]
    %6 = vst [vmem:[#allocation1] sm:%s4] %v5
    %v7 = vld [vmem:[#allocation1] sm:$0x1]
    %vm8 = vcmask 261120
    %9 = vst.msk [vmem:[#allocation0] sm:$0x1] %vm8, %v7
    %s10 = scalar_lea.vmem [#allocation1], 3
    %v11 = vld [vmem:[%s10] sm:$0x1]
    %12 = vrot.lane.b32.xlu0 %v11, 96
    %v13 = vpop.permute.xlu0 %12
    %vm14 = vcmask 1048320
    %15 = vst.msk [vmem:[#allocation0] sm:$0x1] %vm14, %v13
    %s16 = scalar_lea.vmem [#allocation1], 2
    %v17 = vld [vmem:[%s16] sm:$0x1]
    %18 = vrot.lane.b32.xlu0 %v17, 64
    %v19 = vpop.permute.xlu0 %18
    %vm20 = vcmask 785920
    %21 = vst.msk [vmem:[#allocation0] sm:$0x1] %vm20, %v19
    %s22 = scalar_lea.vmem [#allocation1], 1
    %v23 = vld [vmem:[%s22] sm:$0x1]
    %24 = vrot.lane.b32.xlu0 %v23, 32
    %v25 = vpop.permute.xlu0 %24
    %vm26 = vcmask 523520
    %27 = vst.msk [vmem:[#allocation0] sm:$0x1] %vm26, %v25
    %s29 = sshll.u32 1, 1
    %s30 = ssub.s32 %s29, 1
    %v32 = vld [vmem:[#allocation0] sm:%s30]
    %s33 = sshll.u32 1, 1
    %s34 = ssub.s32 %s33, 1
    %35 = vst [vmem:[%s1] sm:%s34] %v32

// kernel: rotary_attention.1
$region0: #{rotary_attention.1}
  #allocation0 [shape = 'u32[]', space=smem, size = 0x4, offset = 0x4, fixed_abs, tag = 'smem constant byte address 0x4 - core index']
  #allocation1 [shape = 'u32[144,128]{1,0:T(1,128)}', space=vmem, size = 0x12000, scoped, tag = 'internal scratch']
  %s0 = inlined_call_operand.vmem [shape: f32[2,8,128], index: 0, kind: input, shape index: {}]
  %s1 = inlined_call_operand.vmem [shape: f32[2,8,128], index: 1, kind: input, shape index: {}]
  %s2 = inlined_call_operand.vmem [shape: f32[2,8,128], index: 2, kind: input, shape index: {}]
  %s3 = inlined_call_operand.vmem [shape: f32[8,128], index: 3, kind: input, shape index: {}]
  %s4 = inlined_call_operand.vmem [shape: f32[8,128], index: 4, kind: input, shape index: {}]
  %s5 = inlined_call_operand.vmem [shape: f32[8,128], index: 5, kind: input, shape index: {}]
  %s6 = inlined_call_operand.vmem [shape: f32[8,128], index: 6, kind: input, shape index: {}]
  %s7 = inlined_call_operand.hbm [shape: f32[2,8,128], index: 7, kind: output, shape index: {}]
  %s8 = sld [smem:[#allocation0]]
  $region61: #{rotary_attention.1} parent=0
    _
  %s10 = ssub.s32 1, %s8
  %s11 = scalar_select 0, %s10, %s8
  $region1: #{rotary_attention.1} parent=0
    #allocation2 [shape = 'u8[8192]{0}', space=vmem, size = 0x2000, scoped, tag = 'output window, operand 0']
    #allocation3 [shape = 's32[2]{0}', space=sflag, size = 0x8, scoped, tag = 'scoped memory for rotary_attention.1']
    %12 = vsyncpa [#allocation3], 0
    %s13 = scalar_lea.sflag [#allocation3], 1
    %14 = vsyncpa %s13, 0
    loop: start=0, step=1, limit=4
    $region2: #{rotary_attention.1} parent=1 // loop_pre_header
      _
    $region3: #{rotary_attention.1} parent=1 // loop_header
      %s16 = sphi 0, %s20
      %p17 = scmp.ge.s32.totalorder %s16, 4
      %s26 = sphi 0, %s28
      %s29 = sphi 0, %s26
      %s30 = sphi 0, %s29
      %s46 = sphi 0, %s30
      %s52 = sphi 0, %s54
      %s55 = sphi 0, %s52
      %s56 = sphi 0, %s55
      %s72 = sphi 0, %s56
      %s78 = sphi 0, %s80
      %s81 = sphi 0, %s78
      %s82 = sphi 0, %s81
      %s98 = sphi 0, %s82
      %s102 = sphi 0, %s102
      %s104 = sphi 0, %s102
      %s105 = sphi 0, %s104
      %s119 = sphi 0, %s105
      %s123 = sphi 0, %s123
      %s125 = sphi 0, %s123
      %s126 = sphi 0, %s125
      %s140 = sphi 0, %s126
      %s144 = sphi 0, %s144
      %s146 = sphi 0, %s144
      %s147 = sphi 0, %s146
      %s161 = sphi 0, %s147
      %s165 = sphi 0, %s165
      %s167 = sphi 0, %s165
      %s168 = sphi 0, %s167
      %s182 = sphi 0, %s168
      %s188 = sphi 0, %s190
      %s191 = sphi 0, %s188
      %s192 = sphi 0, %s191
      %s208 = sphi 0, %s192
    $region4: #{rotary_attention.1} parent=1 // loop_header_branch
      %19 = sbr.rel (%p17) target = $region8
    $region5: #{rotary_attention.1} parent=1 // loop_body
      %s21 = ssub.s32 %s16, 1
      %s22 = ssub.s32 %s16, 2
      %s23 = sadd.s32 %s16, 1
      %s24 = ssub.s32 %s16, %s23
      %p25 = scmp.eq.s32.totalorder %s24, 0
      %s27 = sadd.s32 %s26, 1
      %s28 = scalar_select %p25, %s26, %s27
      %p31 = pneg %p25
      %p32 = scmp.eq.s32.totalorder %s16, 1
      %p33 = por %p31, %p32
      %p34 = scmp.ne.s32.totalorder %s26, %s29
      %p35 = scmp.eq.s32.totalorder %s16, 0
      %p36 = por %p34, %p35
      %p37 = scmp.ne.s32.totalorder %s26, %s29
      %p38 = scmp.eq.s32.totalorder %s21, 1
      %p39 = por %p37, %p38
      %p40 = scmp.ne.s32.totalorder %s29, %s30
      %p41 = scmp.eq.s32.totalorder %s21, 0
      %p42 = por %p40, %p41
      %p43 = scmp.ne.s32.totalorder %s29, %s30
      %p44 = scmp.eq.s32.totalorder %s22, 1
      %p45 = por %p43, %p44
      %p47 = scmp.ne.s32.totalorder %s30, %s46
      %p48 = scmp.eq.s32.totalorder %s22, 0
      %p49 = por %p47, %p48
      %s50 = ssub.s32 %s16, %s23
      %p51 = scmp.eq.s32.totalorder %s50, 0
      %s53 = sadd.s32 %s52, 1
      %s54 = scalar_select %p51, %s52, %s53
      %p57 = pneg %p51
      %p58 = scmp.eq.s32.totalorder %s16, 1
      %p59 = por %p57, %p58
      %p60 = scmp.ne.s32.totalorder %s52, %s55
      %p61 = scmp.eq.s32.totalorder %s16, 0
      %p62 = por %p60, %p61
      %p63 = scmp.ne.s32.totalorder %s52, %s55
      %p64 = scmp.eq.s32.totalorder %s21, 1
      %p65 = por %p63, %p64
      %p66 = scmp.ne.s32.totalorder %s55, %s56
      %p67 = scmp.eq.s32.totalorder %s21, 0
      %p68 = por %p66, %p67
      %p69 = scmp.ne.s32.totalorder %s55, %s56
      %p70 = scmp.eq.s32.totalorder %s22, 1
      %p71 = por %p69, %p70
      %p73 = scmp.ne.s32.totalorder %s56, %s72
      %p74 = scmp.eq.s32.totalorder %s22, 0
      %p75 = por %p73, %p74
      %s76 = ssub.s32 %s16, %s23
      %p77 = scmp.eq.s32.totalorder %s76, 0
      %s79 = sadd.s32 %s78, 1
      %s80 = scalar_select %p77, %s78, %s79
      %p83 = pneg %p77
      %p84 = scmp.eq.s32.totalorder %s16, 1
      %p85 = por %p83, %p84
      %p86 = scmp.ne.s32.totalorder %s78, %s81
      %p87 = scmp.eq.s32.totalorder %s16, 0
      %p88 = por %p86, %p87
      %p89 = scmp.ne.s32.totalorder %s78, %s81
      %p90 = scmp.eq.s32.totalorder %s21, 1
      %p91 = por %p89, %p90
      %p92 = scmp.ne.s32.totalorder %s81, %s82
      %p93 = scmp.eq.s32.totalorder %s21, 0
      %p94 = por %p92, %p93
      %p95 = scmp.ne.s32.totalorder %s81, %s82
      %p96 = scmp.eq.s32.totalorder %s22, 1
      %p97 = por %p95, %p96
      %p99 = scmp.ne.s32.totalorder %s82, %s98
      %p100 = scmp.eq.s32.totalorder %s22, 0
      %p101 = por %p99, %p100
      %s103 = sadd.s32 %s102, 1
      %p106 = scmp.eq.s32.totalorder %s16, 1
      %p107 = scmp.ne.s32.totalorder %s102, %s104
      %p108 = scmp.eq.s32.totalorder %s16, 0
      %p109 = por %p107, %p108
      %p110 = scmp.ne.s32.totalorder %s102, %s104
      %p111 = scmp.eq.s32.totalorder %s21, 1
      %p112 = por %p110, %p111
      %p113 = scmp.ne.s32.totalorder %s104, %s105
      %p114 = scmp.eq.s32.totalorder %s21, 0
      %p115 = por %p113, %p114
      %p116 = scmp.ne.s32.totalorder %s104, %s105
      %p117 = scmp.eq.s32.totalorder %s22, 1
      %p118 = por %p116, %p117
      %p120 = scmp.ne.s32.totalorder %s105, %s119
      %p121 = scmp.eq.s32.totalorder %s22, 0
      %p122 = por %p120, %p121
      %s124 = sadd.s32 %s123, 1
      %p127 = scmp.eq.s32.totalorder %s16, 1
      %p128 = scmp.ne.s32.totalorder %s123, %s125
      %p129 = scmp.eq.s32.totalorder %s16, 0
      %p130 = por %p128, %p129
      %p131 = scmp.ne.s32.totalorder %s123, %s125
      %p132 = scmp.eq.s32.totalorder %s21, 1
      %p133 = por %p131, %p132
      %p134 = scmp.ne.s32.totalorder %s125, %s126
      %p135 = scmp.eq.s32.totalorder %s21, 0
      %p136 = por %p134, %p135
      %p137 = scmp.ne.s32.totalorder %s125, %s126
      %p138 = scmp.eq.s32.totalorder %s22, 1
      %p139 = por %p137, %p138
      %p141 = scmp.ne.s32.totalorder %s126, %s140
      %p142 = scmp.eq.s32.totalorder %s22, 0
      %p143 = por %p141, %p142
      %s145 = sadd.s32 %s144, 1
      %p148 = scmp.eq.s32.totalorder %s16, 1
      %p149 = scmp.ne.s32.totalorder %s144, %s146
      %p150 = scmp.eq.s32.totalorder %s16, 0
      %p151 = por %p149, %p150
      %p152 = scmp.ne.s32.totalorder %s144, %s146
      %p153 = scmp.eq.s32.totalorder %s21, 1
      %p154 = por %p152, %p153
      %p155 = scmp.ne.s32.totalorder %s146, %s147
      %p156 = scmp.eq.s32.totalorder %s21, 0
      %p157 = por %p155, %p156
      %p158 = scmp.ne.s32.totalorder %s146, %s147
      %p159 = scmp.eq.s32.totalorder %s22, 1
      %p160 = por %p158, %p159
      %p162 = scmp.ne.s32.totalorder %s147, %s161
      %p163 = scmp.eq.s32.totalorder %s22, 0
      %p164 = por %p162, %p163
      %s166 = sadd.s32 %s165, 1
      %p169 = scmp.eq.s32.totalorder %s16, 1
      %p170 = scmp.ne.s32.totalorder %s165, %s167
      %p171 = scmp.eq.s32.totalorder %s16, 0
      %p172 = por %p170, %p171
      %p173 = scmp.ne.s32.totalorder %s165, %s167
      %p174 = scmp.eq.s32.totalorder %s21, 1
      %p175 = por %p173, %p174
      %p176 = scmp.ne.s32.totalorder %s167, %s168
      %p177 = scmp.eq.s32.totalorder %s21, 0
      %p178 = por %p176, %p177
      %p179 = scmp.ne.s32.totalorder %s167, %s168
      %p180 = scmp.eq.s32.totalorder %s22, 1
      %p181 = por %p179, %p180
      %p183 = scmp.ne.s32.totalorder %s168, %s182
      %p184 = scmp.eq.s32.totalorder %s22, 0
      %p185 = por %p183, %p184
      %s186 = ssub.s32 %s16, %s23
      %p187 = scmp.eq.s32.totalorder %s186, 0
      %s189 = sadd.s32 %s188, 1
      %s190 = scalar_select %p187, %s188, %s189
      %p193 = pneg %p187
      %p194 = scmp.eq.s32.totalorder %s16, 1
      %p195 = por %p193, %p194
      %p196 = scmp.ne.s32.totalorder %s188, %s191
      %p197 = scmp.eq.s32.totalorder %s16, 0
      %p198 = por %p196, %p197
      %p199 = scmp.ne.s32.totalorder %s188, %s191
      %p200 = scmp.eq.s32.totalorder %s21, 1
      %p201 = por %p199, %p200
      %p202 = scmp.ne.s32.totalorder %s191, %s192
      %p203 = scmp.eq.s32.totalorder %s21, 0
      %p204 = por %p202, %p203
      %p205 = scmp.ne.s32.totalorder %s191, %s192
      %p206 = scmp.eq.s32.totalorder %s22, 1
      %p207 = por %p205, %p206
      %p209 = scmp.ne.s32.totalorder %s192, %s208
      %p210 = scmp.eq.s32.totalorder %s22, 0
      %p211 = por %p209, %p210
      %p212 = scmp.le.s32.totalorder 1, %s16
      %p213 = scmp.lt.s32.totalorder %s16, 3
      %p214 = pnand %p212, %p213
      %p215 = pneg %p214
      // Predicated region
      $region9: #{rotary_attention.1} parent=5 // pred_check
        _
      $region10: #{rotary_attention.1} parent=5 // pred_check_branch
        %217 = sbr.rel (%p214) target = $region12
      $region11: #{rotary_attention.1} parent=5 // pred_region
        %s218 = ssub.s32 %s16, 1
        // Predicated region
        $region13: #{rotary_attention.1} parent=11 // pred_check
          %p219 = pneg %p115
        $region14: #{rotary_attention.1} parent=11 // pred_check_branch
          %221 = sbr.rel (%p219) target = $region16
        $region15: #{rotary_attention.1} parent=11 // pred_region
          _
        $region16: #{rotary_attention.1} parent=11 // pred_fallthru
          _
        // Predicated region
        $region17: #{rotary_attention.1} parent=11 // pred_check
          %p222 = pneg %p136
        $region18: #{rotary_attention.1} parent=11 // pred_check_branch
          %224 = sbr.rel (%p222) target = $region20
        $region19: #{rotary_attention.1} parent=11 // pred_region
          _
        $region20: #{rotary_attention.1} parent=11 // pred_fallthru
          _
        // Predicated region
        $region21: #{rotary_attention.1} parent=11 // pred_check
          %p225 = pneg %p157
        $region22: #{rotary_attention.1} parent=11 // pred_check_branch
          %227 = sbr.rel (%p225) target = $region24
        $region23: #{rotary_attention.1} parent=11 // pred_region
          _
        $region24: #{rotary_attention.1} parent=11 // pred_fallthru
          _
        // Predicated region
        $region25: #{rotary_attention.1} parent=11 // pred_check
          %p228 = pneg %p178
        $region26: #{rotary_attention.1} parent=11 // pred_check_branch
          %230 = sbr.rel (%p228) target = $region28
        $region27: #{rotary_attention.1} parent=11 // pred_region
          _
        $region28: #{rotary_attention.1} parent=11 // pred_fallthru
          _
      $region12: #{rotary_attention.1} parent=5 // pred_fallthru
        _
      %p231 = scmp.lt.s32.totalorder %s16, 2
      // Predicated region
      $region29: #{rotary_attention.1} parent=5 // pred_check
        %p232 = pneg %p231
      $region30: #{rotary_attention.1} parent=5 // pred_check_branch
        %234 = sbr.rel (%p232) target = $region32
      $region31: #{rotary_attention.1} parent=5 // pred_region
        // Predicated region
        $region33: #{rotary_attention.1} parent=31 // pred_check
          %p235 = pneg %p36
        $region34: #{rotary_attention.1} parent=31 // pred_check_branch
          %237 = sbr.rel (%p235) target = $region36
        $region35: #{rotary_attention.1} parent=31 // pred_region
          %p238 = scmp.lt.s32.totalorder %s16, 1
          %s239 = scalar_select %p238, %s16, 1
          %s240 = smul.addr %s239, 8
          %s241 = scalar_lea.vmem %s0, %s240
        $region36: #{rotary_attention.1} parent=31 // pred_fallthru
          _
        // Predicated region
        $region37: #{rotary_attention.1} parent=31 // pred_check
          %p242 = pneg %p62
        $region38: #{rotary_attention.1} parent=31 // pred_check_branch
          %244 = sbr.rel (%p242) target = $region40
        $region39: #{rotary_attention.1} parent=31 // pred_region
          %p245 = scmp.lt.s32.totalorder %s16, 1
          %s246 = scalar_select %p245, %s16, 1
          %s247 = smul.addr %s246, 8
          %s248 = scalar_lea.vmem %s1, %s247
        $region40: #{rotary_attention.1} parent=31 // pred_fallthru
          _
        // Predicated region
        $region41: #{rotary_attention.1} parent=31 // pred_check
          %p249 = pneg %p88
        $region42: #{rotary_attention.1} parent=31 // pred_check_branch
          %251 = sbr.rel (%p249) target = $region44
        $region43: #{rotary_attention.1} parent=31 // pred_region
          %p252 = scmp.lt.s32.totalorder %s16, 1
          %s253 = scalar_select %p252, %s16, 1
          %s254 = smul.addr %s253, 8
          %s255 = scalar_lea.vmem %s2, %s254
        $region44: #{rotary_attention.1} parent=31 // pred_fallthru
          _
      $region32: #{rotary_attention.1} parent=5 // pred_fallthru
        _
      %p256 = scmp.le.s32.totalorder 1, %s16
      %p257 = scmp.lt.s32.totalorder %s16, 3
      %p258 = pnand %p256, %p257
      %p259 = pneg %p258
      // Predicated region
      $region45: #{rotary_attention.1} parent=5 // pred_check
        _
      $region46: #{rotary_attention.1} parent=5 // pred_check_branch
        %261 = sbr.rel (%p258) target = $region48
      $region47: #{rotary_attention.1} parent=5 // pred_region
        %s262 = ssub.s32 %s16, 1
        %p263 = scmp.lt.s32.totalorder %s21, 1
        %s264 = scalar_select %p263, %s21, 1
        %s265 = smul.addr %s264, 8
        %s266 = scalar_lea.vmem %s0, %s265
        %p267 = pneg %p42
        %p268 = pneg %p39
        %p269 = scmp.lt.s32.totalorder %s21, 1
        %s270 = scalar_select %p269, %s21, 1
        %s271 = smul.addr %s270, 8
        %s272 = scalar_lea.vmem %s1, %s271
        %p273 = pneg %p68
        %p274 = pneg %p65
        %p275 = scmp.lt.s32.totalorder %s21, 1
        %s276 = scalar_select %p275, %s21, 1
        %s277 = smul.addr %s276, 8
        %s278 = scalar_lea.vmem %s2, %s277
        %p279 = pneg %p94
        %p280 = pneg %p91
        %p281 = pneg %p115
        %p282 = pneg %p112
        %p283 = pneg %p136
        %p284 = pneg %p133
        %p285 = pneg %p157
        %p286 = pneg %p154
        %p287 = pneg %p178
        %p288 = pneg %p175
        %p289 = pneg %p204
        %p290 = pneg %p201
        %s291 = sand.u32 %s191, 1
        %s292 = scalar_lea.sflag [#allocation3], %s291
        %s293 = sand.u32 %s191, 1
        %s294 = smul.addr %s293, 8
        %s295 = scalar_lea.vmem [#allocation2], %s294
        %p296 = scmp.lt.s32.totalorder %s21, 1
        %s297 = scalar_select %p296, %s21, 1
        %s298 = smul.addr %s297, 8
        %s299 = scalar_lea.vmem %s0, %s298
        %p300 = scmp.lt.s32.totalorder %s21, 1
        %s301 = scalar_select %p300, %s21, 1
        %s302 = smul.addr %s301, 8
        %s303 = scalar_lea.vmem %s1, %s302
        %p304 = scmp.lt.s32.totalorder %s21, 1
        %s305 = scalar_select %p304, %s21, 1
        %s306 = smul.addr %s305, 8
        %s307 = scalar_lea.vmem %s2, %s306
        %v308 = vld [vmem:[%s299] sm:$0xff]
        %v309 = vld [vmem:[%s303] sm:$0xff]
        %v310 = vld [vmem:[%s307] sm:$0xff]
        %v311 = vld [vmem:[%s3] sm:$0xff]
        %v312 = vld [vmem:[%s4] sm:$0xff]
        %v313 = vsub.f32 0.0, %v308
        %315 = vrot.lane.b32.xlu0 %v313, 120
        %v316 = vpop.permute.xlu0 %315
        %319 = vrot.lane.b32.xlu0 %v308, 8
        %v320 = vpop.permute.xlu0 %319
        %vm322 = vcmask 64512
        %v323 = vsel %vm322, %v316, %v320
        %vm324 = vcmask 130048
        %v325 = vsel %vm324, %v323, %v308
        %vm326 = vcmask 261120
        %v327 = vsel %vm326, %v325, %v316
        %vm328 = vcmask 326656
        %v329 = vsel %vm328, %v327, %v320
        %vm330 = vcmask 392192
        %v331 = vsel %vm330, %v329, %v308
        %vm332 = vcmask 523264
        %v333 = vsel %vm332, %v331, %v316
        %vm334 = vcmask 588800
        %v335 = vsel %vm334, %v333, %v320
        %vm336 = vcmask 654336
        %v337 = vsel %vm336, %v335, %v308
        %vm338 = vcmask 785408
        %v339 = vsel %vm338, %v337, %v316
        %vm340 = vcmask 850944
        %v341 = vsel %vm340, %v339, %v320
        %vm342 = vcmask 916480
        %v343 = vsel %vm342, %v341, %v308
        %v344 = vmul.f32 %v308, %v311
        %v345 = vmul.f32 %v343, %v312
        %v346 = vadd.f32 %v344, %v345
        %v347 = vmul.f32 %v346, 0.17677669
        %v348 = vsub.f32 0.0, %v309
        %350 = vrot.lane.b32.xlu0 %v348, 120
        %v351 = vpop.permute.xlu0 %350
        %354 = vrot.lane.b32.xlu0 %v309, 8
        %v355 = vpop.permute.xlu0 %354
        %v357 = vsel %vm322, %v351, %v355
        %v358 = vsel %vm324, %v357, %v309
        %v359 = vsel %vm326, %v358, %v351
        %v360 = vsel %vm328, %v359, %v355
        %v361 = vsel %vm330, %v360, %v309
        %v362 = vsel %vm332, %v361, %v351
        %v363 = vsel %vm334, %v362, %v355
        %v364 = vsel %vm336, %v363, %v309
        %v365 = vsel %vm338, %v364, %v351
        %v366 = vsel %vm340, %v365, %v355
        %v367 = vsel %vm342, %v366, %v309
        %v368 = vmul.f32 %v309, %v311
        %v369 = vmul.f32 %v367, %v312
        %v370 = vadd.f32 %v368, %v369
        %v371 = vld [vmem:[%s5] sm:$0xff]
        %v372 = vld [vmem:[%s6] sm:$0xff]
        %v373 = vlaneseq
        %v374 = vand.u32 %v373, 127
        %vm375 = vcmp.le.s32.totalorder %v374, 8
        %v376 = vsel %vm375, 0.0, -1e+30
        %v378 = vsel %vm326, %v347, 0
        %v381 = vsel %vm326, %v370, 0
        %v384 = vsel %vm326, %v371, 0
        %386 = vmatprep.subr.mxu0 0.0
        %387 = vmatpush1.xpose.msra.mxu0 0.0
        %388 = vmatprep.subr.mxu0 0.0
        %389 = vmatpush1.xpose.msra.mxu0 0.0
        %390 = vmatprep.subr.mxu0 0.0
        %391 = vmatpush1.xpose.msra.mxu0 0.0
        %392 = vmatprep.subr.mxu0 0.0
        %393 = vmatpush1.xpose.msra.mxu0 0.0
        %394 = vmatprep.subr.mxu0 0.0
        %395 = vmatpush1.xpose.msra.mxu0 0.0
        %396 = vmatprep.subr.mxu0 0.0
        %397 = vmatpush1.xpose.msra.mxu0 0.0
        %398 = vmatprep.subr.mxu0 0.0
        %399 = vmatpush1.xpose.msra.mxu0 0.0
        %400 = vmatprep.subr.mxu0 0.0
        %401 = vmatpush1.xpose.msra.mxu0 0.0
        %402 = vmatprep.subr.mxu0 0.0
        %403 = vmatpush1.xpose.msra.mxu0 0.0
        %404 = vmatprep.subr.mxu0 0.0
        %405 = vmatpush1.xpose.msra.mxu0 0.0
        %406 = vmatprep.subr.mxu0 0.0
        %407 = vmatpush1.xpose.msra.mxu0 0.0
        %408 = vmatprep.subr.mxu0 0.0
        %409 = vmatpush1.xpose.msra.mxu0 0.0
        %410 = vmatprep.subr.mxu0 0.0
        %411 = vmatpush1.xpose.msra.mxu0 0.0
        %412 = vmatprep.subr.mxu0 0.0
        %413 = vmatpush1.xpose.msra.mxu0 0.0
        %414 = vmatprep.subr.mxu0 0.0
        %415 = vmatpush1.xpose.msra.mxu0 %v384
        %416 = vmatprep.subr.mxu0 0.0
        %417 = vmatpush1.xpose.msra.mxu0 %v381
        %418 = vmatprep.subr.mxu0 0.0
        %419 = vmatpush2.xpose.msra.mxu0 0.0
        %420 = vmatprep.subr.mxu0 0.0
        %421 = vmatpush2.xpose.msra.mxu0 0.0
        %422 = vmatprep.subr.mxu0 0.0
        %423 = vmatpush2.xpose.msra.mxu0 0.0
        %424 = vmatprep.subr.mxu0 0.0
        %425 = vmatpush2.xpose.msra.mxu0 0.0
        %426 = vmatprep.subr.mxu0 0.0
        %427 = vmatpush2.xpose.msra.mxu0 0.0
        %428 = vmatprep.subr.mxu0 0.0
        %429 = vmatpush2.xpose.msra.mxu0 0.0
        %430 = vmatprep.subr.mxu0 0.0
        %431 = vmatpush2.xpose.msra.mxu0 0.0
        %432 = vmatprep.subr.mxu0 0.0
        %433 = vmatpush2.xpose.msra.mxu0 0.0
        %434 = vmatprep.subr.mxu0 0.0
        %435 = vmatpush2.xpose.msra.mxu0 0.0
        %436 = vmatprep.subr.mxu0 0.0
        %437 = vmatpush2.xpose.msra.mxu0 0.0
        %438 = vmatprep.subr.mxu0 0.0
        %439 = vmatpush2.xpose.msra.mxu0 0.0
        %440 = vmatprep.subr.mxu0 0.0
        %441 = vmatpush2.xpose.msra.mxu0 0.0
        %442 = vmatprep.subr.mxu0 0.0
        %443 = vmatpush2.xpose.msra.mxu0 0.0
        %444 = vmatprep.subr.mxu0 0.0
        %445 = vmatpush2.xpose.msra.mxu0 0.0
        %446 = vmatprep.subr.mxu0 0.0
        %447 = vmatpush2.xpose.msra.mxu0 0.0
        %448 = vmatprep.subr.mxu0 0.0
        %449 = vmatpush2.xpose.msra.mxu0 0.0
        %450 = vmatprep.mubr.f32.mxu0 0.0
        %451 = vmatmul.mubr.f32.gmra.mxu0 %v378
        %v452 = vpop.f32.mrf.mxu0
        %v453 = vadd.f32 %v376, %v452
        %v454 = vpop.f32.mrf.mxu0
        %455 = vdwg.mxu0
        %v456 = vsel %vm324, %v453, -inf
        %457 = vmax.xlane.f32.xlu0 %v456
        %v458 = vpop.xlane.xlu0 %457
        %v459 = vsub.f32 %v453, %v458
        %v460 = vmul.f32 %v459, 1.442695
        %v461 = vpow.pop %v460
        %v462 = vsel %vm324, %v461, 0.0
        %463 = vadd.xlane.f32.xlu0 %v462
        %v464 = vpop.xlane.xlu0 %463
        %v466 = vsel %vm324, %v461, 0
        %468 = vmatprep.subr.mxu0 0.0
        %469 = vmatpush1.msra.mxu0 0.0
        %470 = vmatprep.subr.mxu0 0.0
        %471 = vmatpush1.msra.mxu0 0.0
        %472 = vmatprep.subr.mxu0 0.0
        %473 = vmatpush1.msra.mxu0 0.0
        %474 = vmatprep.subr.mxu0 0.0
        %475 = vmatpush1.msra.mxu0 0.0
        %476 = vmatprep.subr.mxu0 0.0
        %477 = vmatpush1.msra.mxu0 0.0
        %478 = vmatprep.subr.mxu0 0.0
        %479 = vmatpush1.msra.mxu0 0.0
        %480 = vmatprep.subr.mxu0 0.0
        %481 = vmatpush1.msra.mxu0 0.0
        %482 = vmatprep.subr.mxu0 0.0
        %483 = vmatpush1.msra.mxu0 0.0
        %484 = vmatprep.subr.mxu0 0.0
        %485 = vmatpush1.msra.mxu0 0.0
        %486 = vmatprep.subr.mxu0 0.0
        %487 = vmatpush1.msra.mxu0 0.0
        %488 = vmatprep.subr.mxu0 0.0
        %489 = vmatpush1.msra.mxu0 0.0
        %490 = vmatprep.subr.mxu0 0.0
        %491 = vmatpush1.msra.mxu0 0.0
        %492 = vmatprep.subr.mxu0 0.0
        %493 = vmatpush1.msra.mxu0 0.0
        %494 = vmatprep.subr.mxu0 0.0
        %495 = vmatpush1.msra.mxu0 0.0
        %496 = vmatprep.subr.mxu0 0.0
        %497 = vmatpush1.msra.mxu0 %v372
        %498 = vmatprep.subr.mxu0 0.0
        %499 = vmatpush1.msra.mxu0 %v310
        %500 = vmatprep.subr.mxu0 0.0
        %501 = vmatpush2.msra.mxu0 0.0
        %502 = vmatprep.subr.mxu0 0.0
        %503 = vmatpush2.msra.mxu0 0.0
        %504 = vmatprep.subr.mxu0 0.0
        %505 = vmatpush2.msra.mxu0 0.0
        %506 = vmatprep.subr.mxu0 0.0
        %507 = vmatpush2.msra.mxu0 0.0
        %508 = vmatprep.subr.mxu0 0.0
        %509 = vmatpush2.msra.mxu0 0.0
        %510 = vmatprep.subr.mxu0 0.0
        %511 = vmatpush2.msra.mxu0 0.0
        %512 = vmatprep.subr.mxu0 0.0
        %513 = vmatpush2.msra.mxu0 0.0
        %514 = vmatprep.subr.mxu0 0.0
        %515 = vmatpush2.msra.mxu0 0.0
        %516 = vmatprep.subr.mxu0 0.0
        %517 = vmatpush2.msra.mxu0 0.0
        %518 = vmatprep.subr.mxu0 0.0
        %519 = vmatpush2.msra.mxu0 0.0
        %520 = vmatprep.subr.mxu0 0.0
        %521 = vmatpush2.msra.mxu0 0.0
        %522 = vmatprep.subr.mxu0 0.0
        %523 = vmatpush2.msra.mxu0 0.0
        %524 = vmatprep.subr.mxu0 0.0
        %525 = vmatpush2.msra.mxu0 0.0
        %526 = vmatprep.subr.mxu0 0.0
        %527 = vmatpush2.msra.mxu0 0.0
        %528 = vmatprep.subr.mxu0 0.0
        %529 = vmatpush2.msra.mxu0 0.0
        %530 = vmatprep.subr.mxu0 0.0
        %531 = vmatpush2.msra.mxu0 0.0
        %532 = vmatprep.mubr.f32.mxu0 0.0
        %533 = vmatmul.mubr.f32.gmra.mxu0 %v466
        %v534 = vpop.f32.mrf.mxu0
        %v535 = vadd.f32 0.0, %v534
        %v536 = vpop.f32.mrf.mxu0
        %537 = vdwg.mxu0
        %v538 = vrcp.pop %v464
        %v539 = vmul.f32 %v535, %v538
        %540 = vrot.lane.b32.xlu0 %v347, 96
        %v541 = vpop.permute.xlu0 %540
        %542 = vrot.lane.b32.xlu0 %v370, 96
        %v543 = vpop.permute.xlu0 %542
        %544 = vrot.lane.b32.xlu0 %v371, 96
        %v545 = vpop.permute.xlu0 %544
        %v546 = vsel %vm326, %v541, 0
        %v548 = vsel %vm326, %v543, 0
        %v550 = vsel %vm326, %v545, 0
        %552 = vmatprep.subr.mxu0 0.0
        %553 = vmatpush1.xpose.msra.mxu0 0.0
        %554 = vmatprep.subr.mxu0 0.0
        %555 = vmatpush1.xpose.msra.mxu0 0.0
        %556 = vmatprep.subr.mxu0 0.0
        %557 = vmatpush1.xpose.msra.mxu0 0.0
        %558 = vmatprep.subr.mxu0 0.0
        %559 = vmatpush1.xpose.msra.mxu0 0.0
        %560 = vmatprep.subr.mxu0 0.0
        %561 = vmatpush1.xpose.msra.mxu0 0.0
        %562 = vmatprep.subr.mxu0 0.0
        %563 = vmatpush1.xpose.msra.mxu0 0.0
        %564 = vmatprep.subr.mxu0 0.0
        %565 = vmatpush1.xpose.msra.mxu0 0.0
        %566 = vmatprep.subr.mxu0 0.0
        %567 = vmatpush1.xpose.msra.mxu0 0.0
        %568 = vmatprep.subr.mxu0 0.0
        %569 = vmatpush1.xpose.msra.mxu0 0.0
        %570 = vmatprep.subr.mxu0 0.0
        %571 = vmatpush1.xpose.msra.mxu0 0.0
        %572 = vmatprep.subr.mxu0 0.0
        %573 = vmatpush1.xpose.msra.mxu0 0.0
        %574 = vmatprep.subr.mxu0 0.0
        %575 = vmatpush1.xpose.msra.mxu0 0.0
        %576 = vmatprep.subr.mxu0 0.0
        %577 = vmatpush1.xpose.msra.mxu0 0.0
        %578 = vmatprep.subr.mxu0 0.0
        %579 = vmatpush1.xpose.msra.mxu0 0.0
        %580 = vmatprep.subr.mxu0 0.0
        %581 = vmatpush1.xpose.msra.mxu0 %v550
        %582 = vmatprep.subr.mxu0 0.0
        %583 = vmatpush1.xpose.msra.mxu0 %v548
        %584 = vmatprep.subr.mxu0 0.0
        %585 = vmatpush2.xpose.msra.mxu0 0.0
        %586 = vmatprep.subr.mxu0 0.0
        %587 = vmatpush2.xpose.msra.mxu0 0.0
        %588 = vmatprep.subr.mxu0 0.0
        %589 = vmatpush2.xpose.msra.mxu0 0.0
        %590 = vmatprep.subr.mxu0 0.0
        %591 = vmatpush2.xpose.msra.mxu0 0.0
        %592 = vmatprep.subr.mxu0 0.0
        %593 = vmatpush2.xpose.msra.mxu0 0.0
        %594 = vmatprep.subr.mxu0 0.0
        %595 = vmatpush2.xpose.msra.mxu0 0.0
        %596 = vmatprep.subr.mxu0 0.0
        %597 = vmatpush2.xpose.msra.mxu0 0.0
        %598 = vmatprep.subr.mxu0 0.0
        %599 = vmatpush2.xpose.msra.mxu0 0.0
        %600 = vmatprep.subr.mxu0 0.0
        %601 = vmatpush2.xpose.msra.mxu0 0.0
        %602 = vmatprep.subr.mxu0 0.0
        %603 = vmatpush2.xpose.msra.mxu0 0.0
        %604 = vmatprep.subr.mxu0 0.0
        %605 = vmatpush2.xpose.msra.mxu0 0.0
        %606 = vmatprep.subr.mxu0 0.0
        %607 = vmatpush2.xpose.msra.mxu0 0.0
        %608 = vmatprep.subr.mxu0 0.0
        %609 = vmatpush2.xpose.msra.mxu0 0.0
        %610 = vmatprep.subr.mxu0 0.0
        %611 = vmatpush2.xpose.msra.mxu0 0.0
        %612 = vmatprep.subr.mxu0 0.0
        %613 = vmatpush2.xpose.msra.mxu0 0.0
        %614 = vmatprep.subr.mxu0 0.0
        %615 = vmatpush2.xpose.msra.mxu0 0.0
        %616 = vmatprep.mubr.f32.mxu0 0.0
        %617 = vmatmul.mubr.f32.gmra.mxu0 %v546
        %v618 = vpop.f32.mrf.mxu0
        %v619 = vadd.f32 %v376, %v618
        %v620 = vpop.f32.mrf.mxu0
        %621 = vdwg.mxu0
        %v622 = vsel %vm324, %v619, -inf
        %623 = vmax.xlane.f32.xlu0 %v622
        %v624 = vpop.xlane.xlu0 %623
        %v625 = vsub.f32 %v619, %v624
        %v626 = vmul.f32 %v625, 1.442695
        %v627 = vpow.pop %v626
        %v628 = vsel %vm324, %v627, 0.0
        %629 = vadd.xlane.f32.xlu0 %v628
        %v630 = vpop.xlane.xlu0 %629
        %633 = vrot.lane.b32.xlu0 %v310, 96
        %v634 = vpop.permute.xlu0 %633
        %635 = vrot.lane.b32.xlu0 %v372, 96
        %v636 = vpop.permute.xlu0 %635
        %v640 = vsel %vm324, %v627, 0
        %642 = vmatprep.subr.mxu0 0.0
        %643 = vmatpush1.msra.mxu0 0.0
        %644 = vmatprep.subr.mxu0 0.0
        %645 = vmatpush1.msra.mxu0 0.0
        %646 = vmatprep.subr.mxu0 0.0
        %647 = vmatpush1.msra.mxu0 0.0
        %648 = vmatprep.subr.mxu0 0.0
        %649 = vmatpush1.msra.mxu0 0.0
        %650 = vmatprep.subr.mxu0 0.0
        %651 = vmatpush1.msra.mxu0 0.0
        %652 = vmatprep.subr.mxu0 0.0
        %653 = vmatpush1.msra.mxu0 0.0
        %654 = vmatprep.subr.mxu0 0.0
        %655 = vmatpush1.msra.mxu0 0.0
        %656 = vmatprep.subr.mxu0 0.0
        %657 = vmatpush1.msra.mxu0 0.0
        %658 = vmatprep.subr.mxu0 0.0
        %659 = vmatpush1.msra.mxu0 0.0
        %660 = vmatprep.subr.mxu0 0.0
        %661 = vmatpush1.msra.mxu0 0.0
        %662 = vmatprep.subr.mxu0 0.0
        %663 = vmatpush1.msra.mxu0 0.0
        %664 = vmatprep.subr.mxu0 0.0
        %665 = vmatpush1.msra.mxu0 0.0
        %666 = vmatprep.subr.mxu0 0.0
        %667 = vmatpush1.msra.mxu0 0.0
        %668 = vmatprep.subr.mxu0 0.0
        %669 = vmatpush1.msra.mxu0 0.0
        %670 = vmatprep.subr.mxu0 0.0
        %671 = vmatpush1.msra.mxu0 %v636
        %672 = vmatprep.subr.mxu0 0.0
        %673 = vmatpush1.msra.mxu0 %v634
        %674 = vmatprep.subr.mxu0 0.0
        %675 = vmatpush2.msra.mxu0 0.0
        %676 = vmatprep.subr.mxu0 0.0
        %677 = vmatpush2.msra.mxu0 0.0
        %678 = vmatprep.subr.mxu0 0.0
        %679 = vmatpush2.msra.mxu0 0.0
        %680 = vmatprep.subr.mxu0 0.0
        %681 = vmatpush2.msra.mxu0 0.0
        %682 = vmatprep.subr.mxu0 0.0
        %683 = vmatpush2.msra.mxu0 0.0
        %684 = vmatprep.subr.mxu0 0.0
        %685 = vmatpush2.msra.mxu0 0.0
        %686 = vmatprep.subr.mxu0 0.0
        %687 = vmatpush2.msra.mxu0 0.0
        %688 = vmatprep.subr.mxu0 0.0
        %689 = vmatpush2.msra.mxu0 0.0
        %690 = vmatprep.subr.mxu0 0.0
        %691 = vmatpush2.msra.mxu0 0.0
        %692 = vmatprep.subr.mxu0 0.0
        %693 = vmatpush2.msra.mxu0 0.0
        %694 = vmatprep.subr.mxu0 0.0
        %695 = vmatpush2.msra.mxu0 0.0
        %696 = vmatprep.subr.mxu0 0.0
        %697 = vmatpush2.msra.mxu0 0.0
        %698 = vmatprep.subr.mxu0 0.0
        %699 = vmatpush2.msra.mxu0 0.0
        %700 = vmatprep.subr.mxu0 0.0
        %701 = vmatpush2.msra.mxu0 0.0
        %702 = vmatprep.subr.mxu0 0.0
        %703 = vmatpush2.msra.mxu0 0.0
        %704 = vmatprep.subr.mxu0 0.0
        %705 = vmatpush2.msra.mxu0 0.0
        %706 = vmatprep.mubr.f32.mxu0 0.0
        %707 = vmatmul.mubr.f32.gmra.mxu0 %v640
        %v708 = vpop.f32.mrf.mxu0
        %v709 = vadd.f32 0.0, %v708
        %v710 = vpop.f32.mrf.mxu0
        %711 = vdwg.mxu0
        %v712 = vrcp.pop %v630
        %v713 = vmul.f32 %v709, %v712
        %714 = vrot.lane.b32.xlu0 %v347, 64
        %v715 = vpop.permute.xlu0 %714
        %716 = vrot.lane.b32.xlu0 %v370, 64
        %v717 = vpop.permute.xlu0 %716
        %718 = vrot.lane.b32.xlu0 %v371, 64
        %v719 = vpop.permute.xlu0 %718
        %v720 = vsel %vm326, %v715, 0
        %v722 = vsel %vm326, %v717, 0
        %v724 = vsel %vm326, %v719, 0
        %726 = vmatprep.subr.mxu0 0.0
        %727 = vmatpush1.xpose.msra.mxu0 0.0
        %728 = vmatprep.subr.mxu0 0.0
        %729 = vmatpush1.xpose.msra.mxu0 0.0
        %730 = vmatprep.subr.mxu0 0.0
        %731 = vmatpush1.xpose.msra.mxu0 0.0
        %732 = vmatprep.subr.mxu0 0.0
        %733 = vmatpush1.xpose.msra.mxu0 0.0
        %734 = vmatprep.subr.mxu0 0.0
        %735 = vmatpush1.xpose.msra.mxu0 0.0
        %736 = vmatprep.subr.mxu0 0.0
        %737 = vmatpush1.xpose.msra.mxu0 0.0
        %738 = vmatprep.subr.mxu0 0.0
        %739 = vmatpush1.xpose.msra.mxu0 0.0
        %740 = vmatprep.subr.mxu0 0.0
        %741 = vmatpush1.xpose.msra.mxu0 0.0
        %742 = vmatprep.subr.mxu0 0.0
        %743 = vmatpush1.xpose.msra.mxu0 0.0
        %744 = vmatprep.subr.mxu0 0.0
        %745 = vmatpush1.xpose.msra.mxu0 0.0
        %746 = vmatprep.subr.mxu0 0.0
        %747 = vmatpush1.xpose.msra.mxu0 0.0
        %748 = vmatprep.subr.mxu0 0.0
        %749 = vmatpush1.xpose.msra.mxu0 0.0
        %750 = vmatprep.subr.mxu0 0.0
        %751 = vmatpush1.xpose.msra.mxu0 0.0
        %752 = vmatprep.subr.mxu0 0.0
        %753 = vmatpush1.xpose.msra.mxu0 0.0
        %754 = vmatprep.subr.mxu0 0.0
        %755 = vmatpush1.xpose.msra.mxu0 %v724
        %756 = vmatprep.subr.mxu0 0.0
        %757 = vmatpush1.xpose.msra.mxu0 %v722
        %758 = vmatprep.subr.mxu0 0.0
        %759 = vmatpush2.xpose.msra.mxu0 0.0
        %760 = vmatprep.subr.mxu0 0.0
        %761 = vmatpush2.xpose.msra.mxu0 0.0
        %762 = vmatprep.subr.mxu0 0.0
        %763 = vmatpush2.xpose.msra.mxu0 0.0
        %764 = vmatprep.subr.mxu0 0.0
        %765 = vmatpush2.xpose.msra.mxu0 0.0
        %766 = vmatprep.subr.mxu0 0.0
        %767 = vmatpush2.xpose.msra.mxu0 0.0
        %768 = vmatprep.subr.mxu0 0.0
        %769 = vmatpush2.xpose.msra.mxu0 0.0
        %770 = vmatprep.subr.mxu0 0.0
        %771 = vmatpush2.xpose.msra.mxu0 0.0
        %772 = vmatprep.subr.mxu0 0.0
        %773 = vmatpush2.xpose.msra.mxu0 0.0
        %774 = vmatprep.subr.mxu0 0.0
        %775 = vmatpush2.xpose.msra.mxu0 0.0
        %776 = vmatprep.subr.mxu0 0.0
        %777 = vmatpush2.xpose.msra.mxu0 0.0
        %778 = vmatprep.subr.mxu0 0.0
        %779 = vmatpush2.xpose.msra.mxu0 0.0
        %780 = vmatprep.subr.mxu0 0.0
        %781 = vmatpush2.xpose.msra.mxu0 0.0
        %782 = vmatprep.subr.mxu0 0.0
        %783 = vmatpush2.xpose.msra.mxu0 0.0
        %784 = vmatprep.subr.mxu0 0.0
        %785 = vmatpush2.xpose.msra.mxu0 0.0
        %786 = vmatprep.subr.mxu0 0.0
        %787 = vmatpush2.xpose.msra.mxu0 0.0
        %788 = vmatprep.subr.mxu0 0.0
        %789 = vmatpush2.xpose.msra.mxu0 0.0
        %790 = vmatprep.mubr.f32.mxu0 0.0
        %791 = vmatmul.mubr.f32.gmra.mxu0 %v720
        %v792 = vpop.f32.mrf.mxu0
        %v793 = vadd.f32 %v376, %v792
        %v794 = vpop.f32.mrf.mxu0
        %795 = vdwg.mxu0
        %v796 = vsel %vm324, %v793, -inf
        %797 = vmax.xlane.f32.xlu0 %v796
        %v798 = vpop.xlane.xlu0 %797
        %v799 = vsub.f32 %v793, %v798
        %v800 = vmul.f32 %v799, 1.442695
        %v801 = vpow.pop %v800
        %v802 = vsel %vm324, %v801, 0.0
        %803 = vadd.xlane.f32.xlu0 %v802
        %v804 = vpop.xlane.xlu0 %803
        %805 = vrot.lane.b32.xlu0 %v310, 64
        %v806 = vpop.permute.xlu0 %805
        %807 = vrot.lane.b32.xlu0 %v372, 64
        %v808 = vpop.permute.xlu0 %807
        %v812 = vsel %vm324, %v801, 0
        %814 = vmatprep.subr.mxu0 0.0
        %815 = vmatpush1.msra.mxu0 0.0
        %816 = vmatprep.subr.mxu0 0.0
        %817 = vmatpush1.msra.mxu0 0.0
        %818 = vmatprep.subr.mxu0 0.0
        %819 = vmatpush1.msra.mxu0 0.0
        %820 = vmatprep.subr.mxu0 0.0
        %821 = vmatpush1.msra.mxu0 0.0
        %822 = vmatprep.subr.mxu0 0.0
        %823 = vmatpush1.msra.mxu0 0.0
        %824 = vmatprep.subr.mxu0 0.0
        %825 = vmatpush1.msra.mxu0 0.0
        %826 = vmatprep.subr.mxu0 0.0
        %827 = vmatpush1.msra.mxu0 0.0
        %828 = vmatprep.subr.mxu0 0.0
        %829 = vmatpush1.msra.mxu0 0.0
        %830 = vmatprep.subr.mxu0 0.0
        %831 = vmatpush1.msra.mxu0 0.0
        %832 = vmatprep.subr.mxu0 0.0
        %833 = vmatpush1.msra.mxu0 0.0
        %834 = vmatprep.subr.mxu0 0.0
        %835 = vmatpush1.msra.mxu0 0.0
        %836 = vmatprep.subr.mxu0 0.0
        %837 = vmatpush1.msra.mxu0 0.0
        %838 = vmatprep.subr.mxu0 0.0
        %839 = vmatpush1.msra.mxu0 0.0
        %840 = vmatprep.subr.mxu0 0.0
        %841 = vmatpush1.msra.mxu0 0.0
        %842 = vmatprep.subr.mxu0 0.0
        %843 = vmatpush1.msra.mxu0 %v808
        %844 = vmatprep.subr.mxu0 0.0
        %845 = vmatpush1.msra.mxu0 %v806
        %846 = vmatprep.subr.mxu0 0.0
        %847 = vmatpush2.msra.mxu0 0.0
        %848 = vmatprep.subr.mxu0 0.0
        %849 = vmatpush2.msra.mxu0 0.0
        %850 = vmatprep.subr.mxu0 0.0
        %851 = vmatpush2.msra.mxu0 0.0
        %852 = vmatprep.subr.mxu0 0.0
        %853 = vmatpush2.msra.mxu0 0.0
        %854 = vmatprep.subr.mxu0 0.0
        %855 = vmatpush2.msra.mxu0 0.0
        %856 = vmatprep.subr.mxu0 0.0
        %857 = vmatpush2.msra.mxu0 0.0
        %858 = vmatprep.subr.mxu0 0.0
        %859 = vmatpush2.msra.mxu0 0.0
        %860 = vmatprep.subr.mxu0 0.0
        %861 = vmatpush2.msra.mxu0 0.0
        %862 = vmatprep.subr.mxu0 0.0
        %863 = vmatpush2.msra.mxu0 0.0
        %864 = vmatprep.subr.mxu0 0.0
        %865 = vmatpush2.msra.mxu0 0.0
        %866 = vmatprep.subr.mxu0 0.0
        %867 = vmatpush2.msra.mxu0 0.0
        %868 = vmatprep.subr.mxu0 0.0
        %869 = vmatpush2.msra.mxu0 0.0
        %870 = vmatprep.subr.mxu0 0.0
        %871 = vmatpush2.msra.mxu0 0.0
        %872 = vmatprep.subr.mxu0 0.0
        %873 = vmatpush2.msra.mxu0 0.0
        %874 = vmatprep.subr.mxu0 0.0
        %875 = vmatpush2.msra.mxu0 0.0
        %876 = vmatprep.subr.mxu0 0.0
        %877 = vmatpush2.msra.mxu0 0.0
        %878 = vmatprep.mubr.f32.mxu0 0.0
        %879 = vmatmul.mubr.f32.gmra.mxu0 %v812
        %v880 = vpop.f32.mrf.mxu0
        %v881 = vadd.f32 0.0, %v880
        %v882 = vpop.f32.mrf.mxu0
        %883 = vdwg.mxu0
        %v884 = vrcp.pop %v804
        %v885 = vmul.f32 %v881, %v884
        %886 = vrot.lane.b32.xlu0 %v347, 32
        %v887 = vpop.permute.xlu0 %886
        %888 = vrot.lane.b32.xlu0 %v370, 32
        %v889 = vpop.permute.xlu0 %888
        %890 = vrot.lane.b32.xlu0 %v371, 32
        %v891 = vpop.permute.xlu0 %890
        %v892 = vsel %vm326, %v887, 0
        %v894 = vsel %vm326, %v889, 0
        %v896 = vsel %vm326, %v891, 0
        %898 = vmatprep.subr.mxu0 0.0
        %899 = vmatpush1.xpose.msra.mxu0 0.0
        %900 = vmatprep.subr.mxu0 0.0
        %901 = vmatpush1.xpose.msra.mxu0 0.0
        %902 = vmatprep.subr.mxu0 0.0
        %903 = vmatpush1.xpose.msra.mxu0 0.0
        %904 = vmatprep.subr.mxu0 0.0
        %905 = vmatpush1.xpose.msra.mxu0 0.0
        %906 = vmatprep.subr.mxu0 0.0
        %907 = vmatpush1.xpose.msra.mxu0 0.0
        %908 = vmatprep.subr.mxu0 0.0
        %909 = vmatpush1.xpose.msra.mxu0 0.0
        %910 = vmatprep.subr.mxu0 0.0
        %911 = vmatpush1.xpose.msra.mxu0 0.0
        %912 = vmatprep.subr.mxu0 0.0
        %913 = vmatpush1.xpose.msra.mxu0 0.0
        %914 = vmatprep.subr.mxu0 0.0
        %915 = vmatpush1.xpose.msra.mxu0 0.0
        %916 = vmatprep.subr.mxu0 0.0
        %917 = vmatpush1.xpose.msra.mxu0 0.0
        %918 = vmatprep.subr.mxu0 0.0
        %919 = vmatpush1.xpose.msra.mxu0 0.0
        %920 = vmatprep.subr.mxu0 0.0
        %921 = vmatpush1.xpose.msra.mxu0 0.0
        %922 = vmatprep.subr.mxu0 0.0
        %923 = vmatpush1.xpose.msra.mxu0 0.0
        %924 = vmatprep.subr.mxu0 0.0
        %925 = vmatpush1.xpose.msra.mxu0 0.0
        %926 = vmatprep.subr.mxu0 0.0
        %927 = vmatpush1.xpose.msra.mxu0 %v896
        %928 = vmatprep.subr.mxu0 0.0
        %929 = vmatpush1.xpose.msra.mxu0 %v894
        %930 = vmatprep.subr.mxu0 0.0
        %931 = vmatpush2.xpose.msra.mxu0 0.0
        %932 = vmatprep.subr.mxu0 0.0
        %933 = vmatpush2.xpose.msra.mxu0 0.0
        %934 = vmatprep.subr.mxu0 0.0
        %935 = vmatpush2.xpose.msra.mxu0 0.0
        %936 = vmatprep.subr.mxu0 0.0
        %937 = vmatpush2.xpose.msra.mxu0 0.0
        %938 = vmatprep.subr.mxu0 0.0
        %939 = vmatpush2.xpose.msra.mxu0 0.0
        %940 = vmatprep.subr.mxu0 0.0
        %941 = vmatpush2.xpose.msra.mxu0 0.0
        %942 = vmatprep.subr.mxu0 0.0
        %943 = vmatpush2.xpose.msra.mxu0 0.0
        %944 = vmatprep.subr.mxu0 0.0
        %945 = vmatpush2.xpose.msra.mxu0 0.0
        %946 = vmatprep.subr.mxu0 0.0
        %947 = vmatpush2.xpose.msra.mxu0 0.0
        %948 = vmatprep.subr.mxu0 0.0
        %949 = vmatpush2.xpose.msra.mxu0 0.0
        %950 = vmatprep.subr.mxu0 0.0
        %951 = vmatpush2.xpose.msra.mxu0 0.0
        %952 = vmatprep.subr.mxu0 0.0
        %953 = vmatpush2.xpose.msra.mxu0 0.0
        %954 = vmatprep.subr.mxu0 0.0
        %955 = vmatpush2.xpose.msra.mxu0 0.0
        %956 = vmatprep.subr.mxu0 0.0
        %957 = vmatpush2.xpose.msra.mxu0 0.0
        %958 = vmatprep.subr.mxu0 0.0
        %959 = vmatpush2.xpose.msra.mxu0 0.0
        %960 = vmatprep.subr.mxu0 0.0
        %961 = vmatpush2.xpose.msra.mxu0 0.0
        %962 = vmatprep.mubr.f32.mxu0 0.0
        %963 = vmatmul.mubr.f32.gmra.mxu0 %v892
        %v964 = vpop.f32.mrf.mxu0
        %v965 = vadd.f32 %v376, %v964
        %v966 = vpop.f32.mrf.mxu0
        %967 = vdwg.mxu0
        %v968 = vsel %vm324, %v965, -inf
        %969 = vmax.xlane.f32.xlu0 %v968
        %v970 = vpop.xlane.xlu0 %969
        %v971 = vsub.f32 %v965, %v970
        %v972 = vmul.f32 %v971, 1.442695
        %v973 = vpow.pop %v972
        %v974 = vsel %vm324, %v973, 0.0
        %975 = vadd.xlane.f32.xlu0 %v974
        %v976 = vpop.xlane.xlu0 %975
        %977 = vrot.lane.b32.xlu0 %v310, 32
        %v978 = vpop.permute.xlu0 %977
        %979 = vrot.lane.b32.xlu0 %v372, 32
        %v980 = vpop.permute.xlu0 %979
        %v984 = vsel %vm324, %v973, 0
        %986 = vmatprep.subr.mxu0 0.0
        %987 = vmatpush1.msra.mxu0 0.0
        %988 = vmatprep.subr.mxu0 0.0
        %989 = vmatpush1.msra.mxu0 0.0
        %990 = vmatprep.subr.mxu0 0.0
        %991 = vmatpush1.msra.mxu0 0.0
        %992 = vmatprep.subr.mxu0 0.0
        %993 = vmatpush1.msra.mxu0 0.0
        %994 = vmatprep.subr.mxu0 0.0
        %995 = vmatpush1.msra.mxu0 0.0
        %996 = vmatprep.subr.mxu0 0.0
        %997 = vmatpush1.msra.mxu0 0.0
        %998 = vmatprep.subr.mxu0 0.0
        %999 = vmatpush1.msra.mxu0 0.0
        %1000 = vmatprep.subr.mxu0 0.0
        %1001 = vmatpush1.msra.mxu0 0.0
        %1002 = vmatprep.subr.mxu0 0.0
        %1003 = vmatpush1.msra.mxu0 0.0
        %1004 = vmatprep.subr.mxu0 0.0
        %1005 = vmatpush1.msra.mxu0 0.0
        %1006 = vmatprep.subr.mxu0 0.0
        %1007 = vmatpush1.msra.mxu0 0.0
        %1008 = vmatprep.subr.mxu0 0.0
        %1009 = vmatpush1.msra.mxu0 0.0
        %1010 = vmatprep.subr.mxu0 0.0
        %1011 = vmatpush1.msra.mxu0 0.0
        %1012 = vmatprep.subr.mxu0 0.0
        %1013 = vmatpush1.msra.mxu0 0.0
        %1014 = vmatprep.subr.mxu0 0.0
        %1015 = vmatpush1.msra.mxu0 %v980
        %1016 = vmatprep.subr.mxu0 0.0
        %1017 = vmatpush1.msra.mxu0 %v978
        %1018 = vmatprep.subr.mxu0 0.0
        %1019 = vmatpush2.msra.mxu0 0.0
        %1020 = vmatprep.subr.mxu0 0.0
        %1021 = vmatpush2.msra.mxu0 0.0
        %1022 = vmatprep.subr.mxu0 0.0
        %1023 = vmatpush2.msra.mxu0 0.0
        %1024 = vmatprep.subr.mxu0 0.0
        %1025 = vmatpush2.msra.mxu0 0.0
        %1026 = vmatprep.subr.mxu0 0.0
        %1027 = vmatpush2.msra.mxu0 0.0
        %1028 = vmatprep.subr.mxu0 0.0
        %1029 = vmatpush2.msra.mxu0 0.0
        %1030 = vmatprep.subr.mxu0 0.0
        %1031 = vmatpush2.msra.mxu0 0.0
        %1032 = vmatprep.subr.mxu0 0.0
        %1033 = vmatpush2.msra.mxu0 0.0
        %1034 = vmatprep.subr.mxu0 0.0
        %1035 = vmatpush2.msra.mxu0 0.0
        %1036 = vmatprep.subr.mxu0 0.0
        %1037 = vmatpush2.msra.mxu0 0.0
        %1038 = vmatprep.subr.mxu0 0.0
        %1039 = vmatpush2.msra.mxu0 0.0
        %1040 = vmatprep.subr.mxu0 0.0
        %1041 = vmatpush2.msra.mxu0 0.0
        %1042 = vmatprep.subr.mxu0 0.0
        %1043 = vmatpush2.msra.mxu0 0.0
        %1044 = vmatprep.subr.mxu0 0.0
        %1045 = vmatpush2.msra.mxu0 0.0
        %1046 = vmatprep.subr.mxu0 0.0
        %1047 = vmatpush2.msra.mxu0 0.0
        %1048 = vmatprep.subr.mxu0 0.0
        %1049 = vmatpush2.msra.mxu0 0.0
        %1050 = vmatprep.mubr.f32.mxu0 0.0
        %1051 = vmatmul.mubr.f32.gmra.mxu0 %v984
        %v1052 = vpop.f32.mrf.mxu0
        %v1053 = vadd.f32 0.0, %v1052
        %v1054 = vpop.f32.mrf.mxu0
        %1055 = vdwg.mxu0
        %v1056 = vrcp.pop %v976
        %v1057 = vmul.f32 %v1053, %v1056
        %1059 = vrot.lane.b32.xlu0 %v713, 32
        %v1060 = vpop.permute.xlu0 %1059
        %1063 = vrot.lane.b32.xlu0 %v885, 64
        %v1064 = vpop.permute.xlu0 %1063
        %1067 = vrot.lane.b32.xlu0 %v1057, 96
        %v1068 = vpop.permute.xlu0 %1067
        %v1070 = vsel %vm326, %v539, %v1060
        %v1071 = vsel %vm332, %v1070, %v1064
        %v1072 = vsel %vm338, %v1071, %v1068
        %1073 = vst [vmem:[%s295] sm:$0xff] %v1072
        %s1074 = sand.u32 %s191, 1
        %s1075 = scalar_lea.sflag [#allocation3], %s1074
        %s1076 = sand.u32 %s191, 1
        %s1077 = smul.addr %s1076, 8
        %s1078 = scalar_lea.vmem [#allocation2], %s1077
        // Predicated region
        $region49: #{rotary_attention.1} parent=47 // pred_check
          %p1079 = pneg %p201
        $region50: #{rotary_attention.1} parent=47 // pred_check_branch
          %1081 = sbr.rel (%p1079) target = $region52
        $region51: #{rotary_attention.1} parent=47 // pred_region
          %s1083 = ssub.s32 128, 128
          %1084 = vsyncadd %s1075, %s1083
          %s1085 = smul.addr %s21, 128
          %s1086 = scalar_lea.hbm %s7, %s1085
          %s1088 = sshll.u32 %s1078, 4
          %s1089 = int_to_ptr.vmem [resolvable:$true] %s1088
          %1091 = dma.vmem_to_hbm [thread:$0]  %s1089, 128, %s1086, %s1075
        $region52: #{rotary_attention.1} parent=47 // pred_fallthru
          _
      $region48: #{rotary_attention.1} parent=5 // pred_fallthru
        _
      %p1092 = scmp.le.s32.totalorder 2, %s16
      // Predicated region
      $region53: #{rotary_attention.1} parent=5 // pred_check
        %p1093 = pneg %p1092
      $region54: #{rotary_attention.1} parent=5 // pred_check_branch
        %1095 = sbr.rel (%p1093) target = $region56
      $region55: #{rotary_attention.1} parent=5 // pred_region
        %s1096 = ssub.s32 %s16, 2
        // Predicated region
        $region57: #{rotary_attention.1} parent=55 // pred_check
          %p1097 = pneg %p207
        $region58: #{rotary_attention.1} parent=55 // pred_check_branch
          %1099 = sbr.rel (%p1097) target = $region60
        $region59: #{rotary_attention.1} parent=55 // pred_region
          %s1100 = sand.u32 %s192, 1
          %s1101 = scalar_lea.sflag [#allocation3], %s1100
          %s1102 = sand.u32 %s192, 1
          %s1103 = smul.addr %s1102, 8
          %s1104 = scalar_lea.vmem [#allocation2], %s1103
          %1105 = dma.done %s1101, 128
        $region60: #{rotary_attention.1} parent=55 // pred_fallthru
          _
      $region56: #{rotary_attention.1} parent=5 // pred_fallthru
        _
    $region6: #{rotary_attention.1} parent=1 // loop_footer
      %s20 = sadd.s32 1, %s16
    $region7: #{rotary_attention.1} parent=1 // loop_footer_branch
      %15 = sbr.rel target = $region3
    $region8: #{rotary_attention.1} parent=1 // loop_exit
      _
    %1106 = vsyncpa [#allocation3], 1
    %s1107 = scalar_lea.sflag [#allocation3], 1
    %1108 = vsyncpa %s1107, 1

</llo_original>
